<compile_context>
chip_gen: v7x
topology: tpu7x:2x2x1
jax: 0.10.0
libtpu: 0.0.40
codegen_flags: <defaults>
</compile_context>

<pallas_src>
import numpy as np
import jax
import jax.numpy as jnp
from jax.experimental import pallas as pl
from jax.experimental.pallas import tpu as pltpu

# ---- hyper-parameters (small, consistent with the module) -------------------
OUTPUT_DIM  = 16          # len(target_words)
EMB_DIM     = 64
HID_DIM     = 32
N_LAYERS    = 2
KERNEL_SIZE = 3
TRG_PAD_IDX = 1           # target_words.stoi['<pad>']
MAX_LENGTH  = 50
SCALE       = float(np.sqrt(0.5))

B       = 2               # batch
TRG_LEN = 8
SRC_LEN = 8

OUT_W   = 128             # lane-dense output slab width (>= OUTPUT_DIM + SRC_LEN)


# ---------------------------- Pallas kernel ---------------------------------
def decoder_kernel(emb_ref, enc_ref, convw_ref, w64_ref, w32_ref, bias_ref,
                   out_ref):
    BT = emb_ref.shape[0]          # B * T
    T  = BT // B
    S  = enc_ref.shape[0] // B
    E  = emb_ref.shape[1]
    H  = HID_DIM
    V  = OUTPUT_DIM

    embedded = emb_ref[...]                            # [BT, E]

    # --- unpack weights (static slices of resident VMEM blocks) -------------
    w_e2h  = w64_ref[:, :H]                            # [E, H]
    w_ae2h = w64_ref[:, H:2 * H]                       # [E, H]
    w_ah2e = w32_ref[:, :E]                            # [H, E]
    w_out  = w32_ref[:, E:E + V]                       # [H, V]  (= w_h2e @ w_fc)
    b_e2h  = bias_ref[0:1, :H]                         # [1, H]
    b_ae2h = bias_ref[1:2, :H]                         # [1, H]
    b_ah2e = bias_ref[2:3, :E]                         # [1, E]
    b_out  = bias_ref[3:4, :V]                         # [1, V]

    # emb2hid: [BT, E] @ [E, H] + [1, H]
    conv_input = (jnp.dot(embedded, w_e2h, preferred_element_type=jnp.float32)
                  + b_e2h)                             # [BT, H]

    # --- per-batch, layer-invariant precomputes (hoisted out of layer loop) --
    A_list, c_list, ez_list = [], [], []
    for b in range(B):
        encv  = enc_ref[b * S:(b + 1) * S, :E]         # encoder_conved   [S, E]
        encz  = enc_ref[b * S:(b + 1) * S, E:]         # encoder_combined [S, E]
        emb_b = embedded[b * T:(b + 1) * T, :]         # [T, E]
        # A = w_ah2e @ encv^T  -> [H, S]
        A_list.append(jax.lax.dot_general(
            w_ah2e, encv, (((1,), (1,)), ((), ())),
            preferred_element_type=jnp.float32))
        # c = (embedded + b_ah2e) @ encv^T -> [T, S]
        c_list.append(jax.lax.dot_general(
            emb_b + b_ah2e, encv, (((1,), (1,)), ((), ())),
            preferred_element_type=jnp.float32))
        # ez = encz @ w_ae2h -> [S, H]
        ez_list.append(jnp.dot(encz, w_ae2h,
                               preferred_element_type=jnp.float32))

    # constant causal pad + "position within batch" row index (hoisted)
    pad_rows = jnp.full((KERNEL_SIZE - 1, H), float(TRG_PAD_IDX), jnp.float32)
    row_t = jax.lax.broadcasted_iota(jnp.int32, (BT, 1), 0) % T

    attention = jnp.zeros((BT, S), jnp.float32)
    for l in range(N_LAYERS):
        # ---- Conv1d as a sum of K shifted matmuls (no lane-concat im2col) ---
        x_pad = jnp.concatenate([pad_rows, conv_input], axis=0)   # [BT+K-1, H]
        acc = None
        for k in range(KERNEL_SIZE):
            s = KERNEL_SIZE - 1 - k                    # causal shift of tap k
            xk = x_pad[k:k + BT, :]                    # rows i -> conv_input[i-s]
            if s > 0:
                # rows with (i mod T) < s must see the pad value (also blocks
                # cross-batch leakage now that batch is folded into rows)
                xk = jnp.where(row_t < s, float(TRG_PAD_IDX), xk)
            part = jnp.dot(xk, convw_ref[l * KERNEL_SIZE + k],
                           preferred_element_type=jnp.float32)    # [BT, 2H]
            acc = part if acc is None else acc + part
        conved2 = acc + bias_ref[4 + l:5 + l, :]                  # [BT, 2H]

        # ---- GLU (sigmoid via exp on EUP + reciprocal) ----------------------
        a_half = conved2[:, :H]
        g_half = conved2[:, H:]
        conved = a_half * pl.reciprocal(1.0 + jnp.exp(-g_half), approx=False)

        # ---- attention (per batch; energy uses hoisted A_b / c_b) -----------
        att_parts, attd_parts = [], []
        for b in range(B):
            conved_b = conved[b * T:(b + 1) * T, :]               # [T, H]
            energy = SCALE * (jnp.dot(conved_b, A_list[b],
                                      preferred_element_type=jnp.float32)
                              + c_list[b])                        # [T, S]
            e_max = jnp.max(energy, axis=-1, keepdims=True)
            e_exp = jnp.exp(energy - e_max)
            denom = jnp.sum(e_exp, axis=-1, keepdims=True)
            attn_b = e_exp * pl.reciprocal(denom, approx=False)   # [T, S]
            att_parts.append(attn_b)
            attd_parts.append(jnp.dot(attn_b, ez_list[b],
                                      preferred_element_type=jnp.float32)
                              + b_ae2h)                           # [T, H]
        attention = jnp.concatenate(att_parts, axis=0)            # [BT, S]
        attended  = jnp.concatenate(attd_parts, axis=0)           # [BT, H]

        conved = (conved + attended) * SCALE
        conved = (conved + conv_input) * SCALE                    # residual
        conv_input = conved

    # ---- fused hid2emb + fc_out ---------------------------------------------
    logits = (jnp.dot(conv_input, w_out, preferred_element_type=jnp.float32)
              + b_out)                                            # [BT, V]

    # one lane-dense full-width store: [logits | attention | zero pad]
    pad_cols = jnp.zeros((BT, OUT_W - V - S), jnp.float32)
    out_ref[...] = jnp.concatenate([logits, attention, pad_cols], axis=1)


# ------------------------------ wrapper --------------------------------------
def run_decoder(trg, encoder_conved, encoder_combined, p):
    Bn, T = trg.shape
    S = encoder_conved.shape[1]
    E, H, V = EMB_DIM, HID_DIM, OUTPUT_DIM
    BT = Bn * T

    # embedding lookups (glue, plain JAX); dropout = identity
    tok = jnp.take(p['tok_emb'], trg, axis=0)                 # [B, T, E]
    pos = p['pos_emb'][:T][None, :, :]                        # [1, T, E]
    embedded = (tok + pos).reshape(BT, E).astype(jnp.float32)

    # encoder tensors packed into one [B*S, 2E] slab -> single DMA
    enc_pack = jnp.concatenate(
        [encoder_conved, encoder_combined], axis=-1).reshape(Bn * S, 2 * E)

    # weight packing / fusion (pure layout + exact reassociation)
    w64 = jnp.concatenate([p['w_e2h'], p['w_ae2h']], axis=1)  # [E, 2H]
    w_out = p['w_h2e'] @ p['w_fc']                            # [H, V]
    b_out = p['b_h2e'] @ p['w_fc'] + p['b_fc']                # [1, V]
    w32 = jnp.concatenate([p['w_ah2e'], w_out], axis=1)       # [H, E+V]

    def pad_cols(x, width):
        return jnp.pad(x, ((0, 0), (0, width - x.shape[1])))

    bias_pack = jnp.concatenate(
        [pad_cols(p['b_e2h'], 2 * H),
         pad_cols(p['b_ae2h'], 2 * H),
         pad_cols(p['b_ah2e'], 2 * H),
         pad_cols(b_out, 2 * H)]
        + [p['conv_b'][l] for l in range(N_LAYERS)]
        + [jnp.zeros((2, 2 * H), jnp.float32)], axis=0)       # [4+N_LAYERS+2, 2H]

    convw = p['conv_w'].reshape(N_LAYERS * KERNEL_SIZE, H, 2 * H)

    fn = pl.pallas_call(
        decoder_kernel,
        grid=(1,),
        in_specs=[
            pl.BlockSpec((BT, E), lambda i: (0, 0)),
            pl.BlockSpec((Bn * S, 2 * E), lambda i: (0, 0)),
            pl.BlockSpec((N_LAYERS * KERNEL_SIZE, H, 2 * H), lambda i: (0, 0, 0)),
            pl.BlockSpec((E, 2 * H), lambda i: (0, 0)),
            pl.BlockSpec((H, E + V), lambda i: (0, 0)),
            pl.BlockSpec((bias_pack.shape[0], 2 * H), lambda i: (0, 0)),
        ],
        out_specs=pl.BlockSpec((BT, OUT_W), lambda i: (0, 0)),
        out_shape=jax.ShapeDtypeStruct((BT, OUT_W), jnp.float32),
        compiler_params=pltpu.CompilerParams(
            dimension_semantics=("arbitrary",)),
    )
    slab = fn(embedded, enc_pack, convw, w64, w32, bias_pack)

    output = slab[:, :V].reshape(Bn, T, V)
    attention = slab[:, V:V + S].reshape(Bn, T, S)
    return output, attention


# ------------------------- pure-JAX reference --------------------------------
def reference(trg, enc_conved, enc_combined, p):
    Bn, T = trg.shape
    tok = jnp.take(p['tok_emb'], trg, axis=0)
    embedded = tok + p['pos_emb'][:T][None]
    conv_input = embedded @ p['w_e2h'] + p['b_e2h']
    attention = None
    for l in range(N_LAYERS):
        pad = jnp.full((Bn, KERNEL_SIZE - 1, HID_DIM), float(TRG_PAD_IDX),
                       jnp.float32)
        x_pad = jnp.concatenate([pad, conv_input], axis=1)
        x_cols = jnp.concatenate(
            [x_pad[:, k:k + T, :] for k in range(KERNEL_SIZE)], axis=2)
        w_mat = p['conv_w'][l].reshape(KERNEL_SIZE * HID_DIM, 2 * HID_DIM)
        conved2 = x_cols @ w_mat + p['conv_b'][l]
        a, g = conved2[..., :HID_DIM], conved2[..., HID_DIM:]
        conved = a * jax.nn.sigmoid(g)
        conved_emb = conved @ p['w_ah2e'] + p['b_ah2e']
        combined = (conved_emb + embedded) * SCALE
        energy = jnp.einsum('bte,bse->bts', combined, enc_conved)
        attention = jax.nn.softmax(energy, axis=-1)
        attn_enc = jnp.einsum('bts,bse->bte', attention, enc_combined)
        attended = attn_enc @ p['w_ae2h'] + p['b_ae2h']
        conved = (conved + attended) * SCALE
        conved = (conved + conv_input) * SCALE
        conv_input = conved
    conved_e = conv_input @ p['w_h2e'] + p['b_h2e']
    logits = conved_e @ p['w_fc'] + p['b_fc']
    return logits, attention


# ------------------------------ params ---------------------------------------
def init_params(key):
    ks = jax.random.split(key, 16)
    n = lambda k, shape, s=0.05: (s * jax.random.normal(k, shape)).astype(jnp.float32)
    # nn.Conv1d weight is [2H, H, K]; store as [L, K, H, 2H] for shifted matmuls:
    # conv_w[l, k, h, o] = W_pt[l, o, h, k]
    conv_w_pt = n(ks[0], (N_LAYERS, 2 * HID_DIM, HID_DIM, KERNEL_SIZE))
    conv_w = jnp.transpose(conv_w_pt, (0, 3, 2, 1))
    return dict(
        tok_emb=n(ks[1], (OUTPUT_DIM, EMB_DIM)),
        pos_emb=n(ks[2], (MAX_LENGTH, EMB_DIM)),
        w_e2h=n(ks[3], (EMB_DIM, HID_DIM)),   b_e2h=n(ks[4], (1, HID_DIM)),
        conv_w=conv_w,                        conv_b=n(ks[5], (N_LAYERS, 1, 2 * HID_DIM)),
        w_ah2e=n(ks[6], (HID_DIM, EMB_DIM)),  b_ah2e=n(ks[7], (1, EMB_DIM)),
        w_ae2h=n(ks[8], (EMB_DIM, HID_DIM)),  b_ae2h=n(ks[9], (1, HID_DIM)),
        w_h2e=n(ks[10], (HID_DIM, EMB_DIM)),  b_h2e=n(ks[11], (1, EMB_DIM)),
        w_fc=n(ks[12], (EMB_DIM, OUTPUT_DIM)), b_fc=n(ks[13], (1, OUTPUT_DIM)),
    )


if __name__ == "__main__":
    key = jax.random.PRNGKey(0)
    kp, kt, ke1, ke2 = jax.random.split(key, 4)

    params = init_params(kp)
    trg = jax.random.randint(kt, (B, TRG_LEN), 0, OUTPUT_DIM, dtype=jnp.int32)
    encoder_conved = (0.1 * jax.random.normal(ke1, (B, SRC_LEN, EMB_DIM))
                      ).astype(jnp.float32)
    encoder_combined = (0.1 * jax.random.normal(ke2, (B, SRC_LEN, EMB_DIM))
                        ).astype(jnp.float32)

    out, attn = run_decoder(trg, encoder_conved, encoder_combined, params)
    out = jax.block_until_ready(out)
    attn = jax.block_until_ready(attn)

    ref_out, ref_attn = reference(trg, encoder_conved, encoder_combined, params)
    np.testing.assert_allclose(np.asarray(out), np.asarray(ref_out),
                               rtol=1e-4, atol=1e-5)
    np.testing.assert_allclose(np.asarray(attn), np.asarray(ref_attn),
                               rtol=1e-4, atol=1e-5)
    assert out.shape == (B, TRG_LEN, OUTPUT_DIM)
    assert attn.shape == (B, TRG_LEN, SRC_LEN)
    print("KERNEL_OK")
</pallas_src>

<mosaic_0001>
module attributes {stable_mosaic.version = 11 : i64} {
  func.func @decoder_kernel(%arg0: i32, %arg1: memref<16x64xf32, #tpu.memory_space<vmem>>, %arg2: memref<16x128xf32, #tpu.memory_space<vmem>>, %arg3: memref<6x32x64xf32, #tpu.memory_space<vmem>>, %arg4: memref<64x64xf32, #tpu.memory_space<vmem>>, %arg5: memref<32x80xf32, #tpu.memory_space<vmem>>, %arg6: memref<8x64xf32, #tpu.memory_space<vmem>>, %arg7: memref<16x128xf32, #tpu.memory_space<vmem>>) attributes {dimension_semantics = [#tpu.dimension_semantics<arbitrary>], iteration_bounds = array<i64: 1>, scalar_prefetch = 0 : i64, scratch_operands = 0 : i64, tpu.core_type = #tpu.core_type<tc>, window_params = [{pipeline_mode = #tpu.pipeline_mode<synchronous>, transform_indices = @transform_0, window_bounds = array<i64: 16, 64>}, {pipeline_mode = #tpu.pipeline_mode<synchronous>, transform_indices = @transform_1, window_bounds = array<i64: 16, 128>}, {pipeline_mode = #tpu.pipeline_mode<synchronous>, transform_indices = @transform_2, window_bounds = array<i64: 6, 32, 64>}, {pipeline_mode = #tpu.pipeline_mode<synchronous>, transform_indices = @transform_3, window_bounds = array<i64: 64, 64>}, {pipeline_mode = #tpu.pipeline_mode<synchronous>, transform_indices = @transform_4, window_bounds = array<i64: 32, 80>}, {pipeline_mode = #tpu.pipeline_mode<synchronous>, transform_indices = @transform_5, window_bounds = array<i64: 8, 64>}, {pipeline_mode = #tpu.pipeline_mode<synchronous>, transform_indices = @transform_6, window_bounds = array<i64: 16, 128>}]} {
    %c0 = arith.constant 0 : index
    %c0_0 = arith.constant 0 : index
    %0 = vector.load %arg1[%c0, %c0_0] : memref<16x64xf32, #tpu.memory_space<vmem>>, vector<16x64xf32>
    %c0_1 = arith.constant 0 : index
    %c0_2 = arith.constant 0 : index
    %1 = vector.load %arg4[%c0_1, %c0_2] : memref<64x64xf32, #tpu.memory_space<vmem>>, vector<64x32xf32>
    %c0_3 = arith.constant 0 : index
    %c32 = arith.constant 32 : index
    %2 = vector.load %arg4[%c0_3, %c32] : memref<64x64xf32, #tpu.memory_space<vmem>>, vector<64x32xf32>
    %c0_4 = arith.constant 0 : index
    %c0_5 = arith.constant 0 : index
    %3 = vector.load %arg5[%c0_4, %c0_5] : memref<32x80xf32, #tpu.memory_space<vmem>>, vector<32x64xf32>
    %c0_6 = arith.constant 0 : index
    %c64 = arith.constant 64 : index
    %4 = vector.load %arg5[%c0_6, %c64] : memref<32x80xf32, #tpu.memory_space<vmem>>, vector<32x16xf32>
    %c0_7 = arith.constant 0 : index
    %c0_8 = arith.constant 0 : index
    %5 = vector.load %arg6[%c0_7, %c0_8] : memref<8x64xf32, #tpu.memory_space<vmem>>, vector<1x32xf32>
    %c1 = arith.constant 1 : index
    %c0_9 = arith.constant 0 : index
    %6 = vector.load %arg6[%c1, %c0_9] : memref<8x64xf32, #tpu.memory_space<vmem>>, vector<1x32xf32>
    %c2 = arith.constant 2 : index
    %c0_10 = arith.constant 0 : index
    %7 = vector.load %arg6[%c2, %c0_10] : memref<8x64xf32, #tpu.memory_space<vmem>>, vector<1x64xf32>
    %c3 = arith.constant 3 : index
    %c0_11 = arith.constant 0 : index
    %8 = vector.load %arg6[%c3, %c0_11] : memref<8x64xf32, #tpu.memory_space<vmem>>, vector<1x16xf32>
    %cst = arith.constant dense<0.000000e+00> : vector<16x32xf32>
    %9 = tpu.matmul %0, %1, %cst {dimension_numbers = #tpu.dot_dimension_numbers<[1], [0], [0], [1], [0, 0, 1, 1], [], []>} : vector<16x64xf32>, vector<64x32xf32>, vector<16x32xf32> -> vector<16x32xf32>
    %10 = vector.broadcast %5 : vector<1x32xf32> to vector<16x32xf32>
    %11 = arith.addf %9, %10 : vector<16x32xf32>
    %c0_12 = arith.constant 0 : index
    %c0_13 = arith.constant 0 : index
    %12 = vector.load %arg2[%c0_12, %c0_13] : memref<16x128xf32, #tpu.memory_space<vmem>>, vector<8x64xf32>
    %c0_14 = arith.constant 0 : index
    %c64_15 = arith.constant 64 : index
    %13 = vector.load %arg2[%c0_14, %c64_15] : memref<16x128xf32, #tpu.memory_space<vmem>>, vector<8x64xf32>
    %14 = vector.extract_strided_slice %0 {offsets = [0, 0], sizes = [8, 64], strides = [1, 1]} : vector<16x64xf32> to vector<8x64xf32>
    %cst_16 = arith.constant dense<0.000000e+00> : vector<32x8xf32>
    %15 = tpu.matmul %3, %12, %cst_16 {dimension_numbers = #tpu.dot_dimension_numbers<[1], [1], [0], [0], [0, 0, 1, 0], [], []>} : vector<32x64xf32>, vector<8x64xf32>, vector<32x8xf32> -> vector<32x8xf32>
    %16 = vector.broadcast %7 : vector<1x64xf32> to vector<8x64xf32>
    %17 = arith.addf %14, %16 : vector<8x64xf32>
    %cst_17 = arith.constant dense<0.000000e+00> : vector<8x8xf32>
    %18 = tpu.matmul %17, %12, %cst_17 {dimension_numbers = #tpu.dot_dimension_numbers<[1], [1], [0], [0], [0, 0, 1, 0], [], []>} : vector<8x64xf32>, vector<8x64xf32>, vector<8x8xf32> -> vector<8x8xf32>
    %cst_18 = arith.constant dense<0.000000e+00> : vector<8x32xf32>
    %19 = tpu.matmul %13, %2, %cst_18 {dimension_numbers = #tpu.dot_dimension_numbers<[1], [0], [0], [1], [0, 0, 1, 1], [], []>} : vector<8x64xf32>, vector<64x32xf32>, vector<8x32xf32> -> vector<8x32xf32>
    %c8 = arith.constant 8 : index
    %c0_19 = arith.constant 0 : index
    %20 = vector.load %arg2[%c8, %c0_19] : memref<16x128xf32, #tpu.memory_space<vmem>>, vector<8x64xf32>
    %c8_20 = arith.constant 8 : index
    %c64_21 = arith.constant 64 : index
    %21 = vector.load %arg2[%c8_20, %c64_21] : memref<16x128xf32, #tpu.memory_space<vmem>>, vector<8x64xf32>
    %22 = vector.extract_strided_slice %0 {offsets = [8, 0], sizes = [8, 64], strides = [1, 1]} : vector<16x64xf32> to vector<8x64xf32>
    %cst_22 = arith.constant dense<0.000000e+00> : vector<32x8xf32>
    %23 = tpu.matmul %3, %20, %cst_22 {dimension_numbers = #tpu.dot_dimension_numbers<[1], [1], [0], [0], [0, 0, 1, 0], [], []>} : vector<32x64xf32>, vector<8x64xf32>, vector<32x8xf32> -> vector<32x8xf32>
    %24 = vector.broadcast %7 : vector<1x64xf32> to vector<8x64xf32>
    %25 = arith.addf %22, %24 : vector<8x64xf32>
    %cst_23 = arith.constant dense<0.000000e+00> : vector<8x8xf32>
    %26 = tpu.matmul %25, %20, %cst_23 {dimension_numbers = #tpu.dot_dimension_numbers<[1], [1], [0], [0], [0, 0, 1, 0], [], []>} : vector<8x64xf32>, vector<8x64xf32>, vector<8x8xf32> -> vector<8x8xf32>
    %cst_24 = arith.constant dense<0.000000e+00> : vector<8x32xf32>
    %27 = tpu.matmul %21, %2, %cst_24 {dimension_numbers = #tpu.dot_dimension_numbers<[1], [0], [0], [1], [0, 0, 1, 1], [], []>} : vector<8x64xf32>, vector<64x32xf32>, vector<8x32xf32> -> vector<8x32xf32>
    %cst_25 = arith.constant 1.000000e+00 : f32
    %28 = vector.broadcast %cst_25 : f32 to vector<2x32xf32>
    %29 = tpu.iota {dimensions = array<i32: 0>} : vector<16x1xi32>
    %c8_i32 = arith.constant 8 : i32
    %c0_i32 = arith.constant 0 : i32
    %30 = arith.cmpi eq, %c8_i32, %c0_i32 : i32
    %c1_i32 = arith.constant 1 : i32
    %31 = arith.select %30, %c1_i32, %c8_i32 : i32
    %32 = vector.broadcast %31 : i32 to vector<16x1xi32>
    %33 = arith.remsi %29, %32 : vector<16x1xi32>
    %c0_i32_26 = arith.constant 0 : i32
    %34 = vector.broadcast %c0_i32_26 : i32 to vector<16x1xi32>
    %35 = arith.cmpi ne, %33, %34 : vector<16x1xi32>
    %c0_i32_27 = arith.constant 0 : i32
    %36 = vector.broadcast %c0_i32_27 : i32 to vector<16x1xi32>
    %37 = arith.cmpi slt, %33, %36 : vector<16x1xi32>
    %c0_i32_28 = arith.constant 0 : i32
    %38 = arith.cmpi slt, %31, %c0_i32_28 : i32
    %39 = vector.broadcast %38 : i1 to vector<16x1xi1>
    %40 = vector.broadcast %39 : vector<16x1xi1> to vector<16x1xi1>
    %41 = arith.xori %37, %40 : vector<16x1xi1>
    %42 = arith.andi %41, %35 : vector<16x1xi1>
    %43 = vector.broadcast %31 : i32 to vector<16x1xi32>
    %44 = arith.addi %33, %43 : vector<16x1xi32>
    %45 = arith.select %42, %44, %33 : vector<16x1xi1>, vector<16x1xi32>
    %46 = tpu.concatenate %28, %11 in 0 : vector<2x32xf32>, vector<16x32xf32> -> vector<18x32xf32>
    %47 = vector.extract_strided_slice %46 {offsets = [0, 0], sizes = [16, 32], strides = [1, 1]} : vector<18x32xf32> to vector<16x32xf32>
    %c2_i32 = arith.constant 2 : i32
    %48 = vector.broadcast %c2_i32 : i32 to vector<16x1xi32>
    %49 = arith.cmpi slt, %45, %48 : vector<16x1xi32>
    %cst_29 = arith.constant 1.000000e+00 : f32
    %50 = vector.shape_cast %49 : vector<16x1xi1> to vector<16x1xi1>
    %51 = vector.broadcast %50 : vector<16x1xi1> to vector<16x32xi1>
    %52 = vector.broadcast %cst_29 : f32 to vector<16x32xf32>
    %53 = arith.select %51, %52, %47 : vector<16x32xi1>, vector<16x32xf32>
    %c0_30 = arith.constant 0 : index
    %c0_31 = arith.constant 0 : index
    %c0_32 = arith.constant 0 : index
    %54 = vector.load %arg3[%c0_30, %c0_31, %c0_32] : memref<6x32x64xf32, #tpu.memory_space<vmem>>, vector<1x32x64xf32>
    %55 = vector.shape_cast %54 : vector<1x32x64xf32> to vector<32x64xf32>
    %cst_33 = arith.constant dense<0.000000e+00> : vector<16x64xf32>
    %56 = tpu.matmul %53, %55, %cst_33 {dimension_numbers = #tpu.dot_dimension_numbers<[1], [0], [0], [1], [0, 0, 1, 1], [], []>} : vector<16x32xf32>, vector<32x64xf32>, vector<16x64xf32> -> vector<16x64xf32>
    %57 = vector.extract_strided_slice %46 {offsets = [1, 0], sizes = [16, 32], strides = [1, 1]} : vector<18x32xf32> to vector<16x32xf32>
    %c1_i32_34 = arith.constant 1 : i32
    %58 = vector.broadcast %c1_i32_34 : i32 to vector<16x1xi32>
    %59 = arith.cmpi slt, %45, %58 : vector<16x1xi32>
    %cst_35 = arith.constant 1.000000e+00 : f32
    %60 = vector.shape_cast %59 : vector<16x1xi1> to vector<16x1xi1>
    %61 = vector.broadcast %60 : vector<16x1xi1> to vector<16x32xi1>
    %62 = vector.broadcast %cst_35 : f32 to vector<16x32xf32>
    %63 = arith.select %61, %62, %57 : vector<16x32xi1>, vector<16x32xf32>
    %c1_36 = arith.constant 1 : index
    %c0_37 = arith.constant 0 : index
    %c0_38 = arith.constant 0 : index
    %64 = vector.load %arg3[%c1_36, %c0_37, %c0_38] : memref<6x32x64xf32, #tpu.memory_space<vmem>>, vector<1x32x64xf32>
    %65 = vector.shape_cast %64 : vector<1x32x64xf32> to vector<32x64xf32>
    %cst_39 = arith.constant dense<0.000000e+00> : vector<16x64xf32>
    %66 = tpu.matmul %63, %65, %cst_39 {dimension_numbers = #tpu.dot_dimension_numbers<[1], [0], [0], [1], [0, 0, 1, 1], [], []>} : vector<16x32xf32>, vector<32x64xf32>, vector<16x64xf32> -> vector<16x64xf32>
    %67 = arith.addf %56, %66 : vector<16x64xf32>
    %68 = vector.extract_strided_slice %46 {offsets = [2, 0], sizes = [16, 32], strides = [1, 1]} : vector<18x32xf32> to vector<16x32xf32>
    %c2_40 = arith.constant 2 : index
    %c0_41 = arith.constant 0 : index
    %c0_42 = arith.constant 0 : index
    %69 = vector.load %arg3[%c2_40, %c0_41, %c0_42] : memref<6x32x64xf32, #tpu.memory_space<vmem>>, vector<1x32x64xf32>
    %70 = vector.shape_cast %69 : vector<1x32x64xf32> to vector<32x64xf32>
    %cst_43 = arith.constant dense<0.000000e+00> : vector<16x64xf32>
    %71 = tpu.matmul %68, %70, %cst_43 {dimension_numbers = #tpu.dot_dimension_numbers<[1], [0], [0], [1], [0, 0, 1, 1], [], []>} : vector<16x32xf32>, vector<32x64xf32>, vector<16x64xf32> -> vector<16x64xf32>
    %72 = arith.addf %67, %71 : vector<16x64xf32>
    %c4 = arith.constant 4 : index
    %c0_44 = arith.constant 0 : index
    %73 = vector.load %arg6[%c4, %c0_44] : memref<8x64xf32, #tpu.memory_space<vmem>>, vector<1x64xf32>
    %74 = vector.broadcast %73 : vector<1x64xf32> to vector<16x64xf32>
    %75 = arith.addf %72, %74 : vector<16x64xf32>
    %76 = vector.extract_strided_slice %75 {offsets = [0, 0], sizes = [16, 32], strides = [1, 1]} : vector<16x64xf32> to vector<16x32xf32>
    %77 = vector.extract_strided_slice %75 {offsets = [0, 32], sizes = [16, 32], strides = [1, 1]} : vector<16x64xf32> to vector<16x32xf32>
    %cst_45 = arith.constant 0.000000e+00 : f32
    %78 = vector.broadcast %cst_45 : f32 to vector<16x32xf32>
    %79 = arith.subf %78, %77 : vector<16x32xf32>
    %80 = math.exp %79 : vector<16x32xf32>
    %cst_46 = arith.constant 1.000000e+00 : f32
    %81 = vector.broadcast %cst_46 : f32 to vector<16x32xf32>
    %82 = arith.addf %81, %80 : vector<16x32xf32>
    %83 = tpu.reciprocal %82 : vector<16x32xf32> -> vector<16x32xf32>
    %84 = arith.mulf %76, %83 : vector<16x32xf32>
    %85 = vector.extract_strided_slice %84 {offsets = [0, 0], sizes = [8, 32], strides = [1, 1]} : vector<16x32xf32> to vector<8x32xf32>
    %cst_47 = arith.constant dense<0.000000e+00> : vector<8x8xf32>
    %86 = tpu.matmul %85, %15, %cst_47 {dimension_numbers = #tpu.dot_dimension_numbers<[1], [0], [0], [1], [0, 0, 1, 1], [], []>} : vector<8x32xf32>, vector<32x8xf32>, vector<8x8xf32> -> vector<8x8xf32>
    %87 = arith.addf %86, %18 : vector<8x8xf32>
    %cst_48 = arith.constant 0.707106769 : f32
    %88 = vector.broadcast %cst_48 : f32 to vector<8x8xf32>
    %89 = arith.mulf %88, %87 : vector<8x8xf32>
    %cst_49 = arith.constant dense<0xFF800000> : vector<8xf32>
    %90 = vector.multi_reduction <maximumf>, %89, %cst_49 [1] : vector<8x8xf32> to vector<8xf32>
    %91 = vector.shape_cast %90 : vector<8xf32> to vector<8x1xf32>
    %92 = vector.broadcast %91 : vector<8x1xf32> to vector<8x8xf32>
    %93 = arith.subf %89, %92 : vector<8x8xf32>
    %94 = math.exp %93 : vector<8x8xf32>
    %cst_50 = arith.constant dense<0.000000e+00> : vector<8xf32>
    %95 = vector.multi_reduction <add>, %94, %cst_50 [1] : vector<8x8xf32> to vector<8xf32>
    %96 = vector.shape_cast %95 : vector<8xf32> to vector<8x1xf32>
    %97 = tpu.reciprocal %96 : vector<8x1xf32> -> vector<8x1xf32>
    %98 = vector.broadcast %97 : vector<8x1xf32> to vector<8x8xf32>
    %99 = arith.mulf %94, %98 : vector<8x8xf32>
    %cst_51 = arith.constant dense<0.000000e+00> : vector<8x32xf32>
    %100 = tpu.matmul %99, %19, %cst_51 {dimension_numbers = #tpu.dot_dimension_numbers<[1], [0], [0], [1], [0, 0, 1, 1], [], []>} : vector<8x8xf32>, vector<8x32xf32>, vector<8x32xf32> -> vector<8x32xf32>
    %101 = vector.broadcast %6 : vector<1x32xf32> to vector<8x32xf32>
    %102 = arith.addf %100, %101 : vector<8x32xf32>
    %103 = vector.extract_strided_slice %84 {offsets = [8, 0], sizes = [8, 32], strides = [1, 1]} : vector<16x32xf32> to vector<8x32xf32>
    %cst_52 = arith.constant dense<0.000000e+00> : vector<8x8xf32>
    %104 = tpu.matmul %103, %23, %cst_52 {dimension_numbers = #tpu.dot_dimension_numbers<[1], [0], [0], [1], [0, 0, 1, 1], [], []>} : vector<8x32xf32>, vector<32x8xf32>, vector<8x8xf32> -> vector<8x8xf32>
    %105 = arith.addf %104, %26 : vector<8x8xf32>
    %cst_53 = arith.constant 0.707106769 : f32
    %106 = vector.broadcast %cst_53 : f32 to vector<8x8xf32>
    %107 = arith.mulf %106, %105 : vector<8x8xf32>
    %cst_54 = arith.constant dense<0xFF800000> : vector<8xf32>
    %108 = vector.multi_reduction <maximumf>, %107, %cst_54 [1] : vector<8x8xf32> to vector<8xf32>
    %109 = vector.shape_cast %108 : vector<8xf32> to vector<8x1xf32>
    %110 = vector.broadcast %109 : vector<8x1xf32> to vector<8x8xf32>
    %111 = arith.subf %107, %110 : vector<8x8xf32>
    %112 = math.exp %111 : vector<8x8xf32>
    %cst_55 = arith.constant dense<0.000000e+00> : vector<8xf32>
    %113 = vector.multi_reduction <add>, %112, %cst_55 [1] : vector<8x8xf32> to vector<8xf32>
    %114 = vector.shape_cast %113 : vector<8xf32> to vector<8x1xf32>
    %115 = tpu.reciprocal %114 : vector<8x1xf32> -> vector<8x1xf32>
    %116 = vector.broadcast %115 : vector<8x1xf32> to vector<8x8xf32>
    %117 = arith.mulf %112, %116 : vector<8x8xf32>
    %cst_56 = arith.constant dense<0.000000e+00> : vector<8x32xf32>
    %118 = tpu.matmul %117, %27, %cst_56 {dimension_numbers = #tpu.dot_dimension_numbers<[1], [0], [0], [1], [0, 0, 1, 1], [], []>} : vector<8x8xf32>, vector<8x32xf32>, vector<8x32xf32> -> vector<8x32xf32>
    %119 = vector.broadcast %6 : vector<1x32xf32> to vector<8x32xf32>
    %120 = arith.addf %118, %119 : vector<8x32xf32>
    %121 = tpu.concatenate %102, %120 in 0 : vector<8x32xf32>, vector<8x32xf32> -> vector<16x32xf32>
    %122 = arith.addf %84, %121 : vector<16x32xf32>
    %cst_57 = arith.constant 0.707106769 : f32
    %123 = vector.broadcast %cst_57 : f32 to vector<16x32xf32>
    %124 = arith.mulf %122, %123 : vector<16x32xf32>
    %125 = arith.addf %124, %11 : vector<16x32xf32>
    %cst_58 = arith.constant 0.707106769 : f32
    %126 = vector.broadcast %cst_58 : f32 to vector<16x32xf32>
    %127 = arith.mulf %125, %126 : vector<16x32xf32>
    %128 = tpu.concatenate %28, %127 in 0 : vector<2x32xf32>, vector<16x32xf32> -> vector<18x32xf32>
    %129 = vector.extract_strided_slice %128 {offsets = [0, 0], sizes = [16, 32], strides = [1, 1]} : vector<18x32xf32> to vector<16x32xf32>
    %c2_i32_59 = arith.constant 2 : i32
    %130 = vector.broadcast %c2_i32_59 : i32 to vector<16x1xi32>
    %131 = arith.cmpi slt, %45, %130 : vector<16x1xi32>
    %cst_60 = arith.constant 1.000000e+00 : f32
    %132 = vector.shape_cast %131 : vector<16x1xi1> to vector<16x1xi1>
    %133 = vector.broadcast %132 : vector<16x1xi1> to vector<16x32xi1>
    %134 = vector.broadcast %cst_60 : f32 to vector<16x32xf32>
    %135 = arith.select %133, %134, %129 : vector<16x32xi1>, vector<16x32xf32>
    %c3_61 = arith.constant 3 : index
    %c0_62 = arith.constant 0 : index
    %c0_63 = arith.constant 0 : index
    %136 = vector.load %arg3[%c3_61, %c0_62, %c0_63] : memref<6x32x64xf32, #tpu.memory_space<vmem>>, vector<1x32x64xf32>
    %137 = vector.shape_cast %136 : vector<1x32x64xf32> to vector<32x64xf32>
    %cst_64 = arith.constant dense<0.000000e+00> : vector<16x64xf32>
    %138 = tpu.matmul %135, %137, %cst_64 {dimension_numbers = #tpu.dot_dimension_numbers<[1], [0], [0], [1], [0, 0, 1, 1], [], []>} : vector<16x32xf32>, vector<32x64xf32>, vector<16x64xf32> -> vector<16x64xf32>
    %139 = vector.extract_strided_slice %128 {offsets = [1, 0], sizes = [16, 32], strides = [1, 1]} : vector<18x32xf32> to vector<16x32xf32>
    %c1_i32_65 = arith.constant 1 : i32
    %140 = vector.broadcast %c1_i32_65 : i32 to vector<16x1xi32>
    %141 = arith.cmpi slt, %45, %140 : vector<16x1xi32>
    %cst_66 = arith.constant 1.000000e+00 : f32
    %142 = vector.shape_cast %141 : vector<16x1xi1> to vector<16x1xi1>
    %143 = vector.broadcast %142 : vector<16x1xi1> to vector<16x32xi1>
    %144 = vector.broadcast %cst_66 : f32 to vector<16x32xf32>
    %145 = arith.select %143, %144, %139 : vector<16x32xi1>, vector<16x32xf32>
    %c4_67 = arith.constant 4 : index
    %c0_68 = arith.constant 0 : index
    %c0_69 = arith.constant 0 : index
    %146 = vector.load %arg3[%c4_67, %c0_68, %c0_69] : memref<6x32x64xf32, #tpu.memory_space<vmem>>, vector<1x32x64xf32>
    %147 = vector.shape_cast %146 : vector<1x32x64xf32> to vector<32x64xf32>
    %cst_70 = arith.constant dense<0.000000e+00> : vector<16x64xf32>
    %148 = tpu.matmul %145, %147, %cst_70 {dimension_numbers = #tpu.dot_dimension_numbers<[1], [0], [0], [1], [0, 0, 1, 1], [], []>} : vector<16x32xf32>, vector<32x64xf32>, vector<16x64xf32> -> vector<16x64xf32>
    %149 = arith.addf %138, %148 : vector<16x64xf32>
    %150 = vector.extract_strided_slice %128 {offsets = [2, 0], sizes = [16, 32], strides = [1, 1]} : vector<18x32xf32> to vector<16x32xf32>
    %c5 = arith.constant 5 : index
    %c0_71 = arith.constant 0 : index
    %c0_72 = arith.constant 0 : index
    %151 = vector.load %arg3[%c5, %c0_71, %c0_72] : memref<6x32x64xf32, #tpu.memory_space<vmem>>, vector<1x32x64xf32>
    %152 = vector.shape_cast %151 : vector<1x32x64xf32> to vector<32x64xf32>
    %cst_73 = arith.constant dense<0.000000e+00> : vector<16x64xf32>
    %153 = tpu.matmul %150, %152, %cst_73 {dimension_numbers = #tpu.dot_dimension_numbers<[1], [0], [0], [1], [0, 0, 1, 1], [], []>} : vector<16x32xf32>, vector<32x64xf32>, vector<16x64xf32> -> vector<16x64xf32>
    %154 = arith.addf %149, %153 : vector<16x64xf32>
    %c5_74 = arith.constant 5 : index
    %c0_75 = arith.constant 0 : index
    %155 = vector.load %arg6[%c5_74, %c0_75] : memref<8x64xf32, #tpu.memory_space<vmem>>, vector<1x64xf32>
    %156 = vector.broadcast %155 : vector<1x64xf32> to vector<16x64xf32>
    %157 = arith.addf %154, %156 : vector<16x64xf32>
    %158 = vector.extract_strided_slice %157 {offsets = [0, 0], sizes = [16, 32], strides = [1, 1]} : vector<16x64xf32> to vector<16x32xf32>
    %159 = vector.extract_strided_slice %157 {offsets = [0, 32], sizes = [16, 32], strides = [1, 1]} : vector<16x64xf32> to vector<16x32xf32>
    %cst_76 = arith.constant 0.000000e+00 : f32
    %160 = vector.broadcast %cst_76 : f32 to vector<16x32xf32>
    %161 = arith.subf %160, %159 : vector<16x32xf32>
    %162 = math.exp %161 : vector<16x32xf32>
    %cst_77 = arith.constant 1.000000e+00 : f32
    %163 = vector.broadcast %cst_77 : f32 to vector<16x32xf32>
    %164 = arith.addf %163, %162 : vector<16x32xf32>
    %165 = tpu.reciprocal %164 : vector<16x32xf32> -> vector<16x32xf32>
    %166 = arith.mulf %158, %165 : vector<16x32xf32>
    %167 = vector.extract_strided_slice %166 {offsets = [0, 0], sizes = [8, 32], strides = [1, 1]} : vector<16x32xf32> to vector<8x32xf32>
    %cst_78 = arith.constant dense<0.000000e+00> : vector<8x8xf32>
    %168 = tpu.matmul %167, %15, %cst_78 {dimension_numbers = #tpu.dot_dimension_numbers<[1], [0], [0], [1], [0, 0, 1, 1], [], []>} : vector<8x32xf32>, vector<32x8xf32>, vector<8x8xf32> -> vector<8x8xf32>
    %169 = arith.addf %168, %18 : vector<8x8xf32>
    %cst_79 = arith.constant 0.707106769 : f32
    %170 = vector.broadcast %cst_79 : f32 to vector<8x8xf32>
    %171 = arith.mulf %170, %169 : vector<8x8xf32>
    %cst_80 = arith.constant dense<0xFF800000> : vector<8xf32>
    %172 = vector.multi_reduction <maximumf>, %171, %cst_80 [1] : vector<8x8xf32> to vector<8xf32>
    %173 = vector.shape_cast %172 : vector<8xf32> to vector<8x1xf32>
    %174 = vector.broadcast %173 : vector<8x1xf32> to vector<8x8xf32>
    %175 = arith.subf %171, %174 : vector<8x8xf32>
    %176 = math.exp %175 : vector<8x8xf32>
    %cst_81 = arith.constant dense<0.000000e+00> : vector<8xf32>
    %177 = vector.multi_reduction <add>, %176, %cst_81 [1] : vector<8x8xf32> to vector<8xf32>
    %178 = vector.shape_cast %177 : vector<8xf32> to vector<8x1xf32>
    %179 = tpu.reciprocal %178 : vector<8x1xf32> -> vector<8x1xf32>
    %180 = vector.broadcast %179 : vector<8x1xf32> to vector<8x8xf32>
    %181 = arith.mulf %176, %180 : vector<8x8xf32>
    %cst_82 = arith.constant dense<0.000000e+00> : vector<8x32xf32>
    %182 = tpu.matmul %181, %19, %cst_82 {dimension_numbers = #tpu.dot_dimension_numbers<[1], [0], [0], [1], [0, 0, 1, 1], [], []>} : vector<8x8xf32>, vector<8x32xf32>, vector<8x32xf32> -> vector<8x32xf32>
    %183 = vector.broadcast %6 : vector<1x32xf32> to vector<8x32xf32>
    %184 = arith.addf %182, %183 : vector<8x32xf32>
    %185 = vector.extract_strided_slice %166 {offsets = [8, 0], sizes = [8, 32], strides = [1, 1]} : vector<16x32xf32> to vector<8x32xf32>
    %cst_83 = arith.constant dense<0.000000e+00> : vector<8x8xf32>
    %186 = tpu.matmul %185, %23, %cst_83 {dimension_numbers = #tpu.dot_dimension_numbers<[1], [0], [0], [1], [0, 0, 1, 1], [], []>} : vector<8x32xf32>, vector<32x8xf32>, vector<8x8xf32> -> vector<8x8xf32>
    %187 = arith.addf %186, %26 : vector<8x8xf32>
    %cst_84 = arith.constant 0.707106769 : f32
    %188 = vector.broadcast %cst_84 : f32 to vector<8x8xf32>
    %189 = arith.mulf %188, %187 : vector<8x8xf32>
    %cst_85 = arith.constant dense<0xFF800000> : vector<8xf32>
    %190 = vector.multi_reduction <maximumf>, %189, %cst_85 [1] : vector<8x8xf32> to vector<8xf32>
    %191 = vector.shape_cast %190 : vector<8xf32> to vector<8x1xf32>
    %192 = vector.broadcast %191 : vector<8x1xf32> to vector<8x8xf32>
    %193 = arith.subf %189, %192 : vector<8x8xf32>
    %194 = math.exp %193 : vector<8x8xf32>
    %cst_86 = arith.constant dense<0.000000e+00> : vector<8xf32>
    %195 = vector.multi_reduction <add>, %194, %cst_86 [1] : vector<8x8xf32> to vector<8xf32>
    %196 = vector.shape_cast %195 : vector<8xf32> to vector<8x1xf32>
    %197 = tpu.reciprocal %196 : vector<8x1xf32> -> vector<8x1xf32>
    %198 = vector.broadcast %197 : vector<8x1xf32> to vector<8x8xf32>
    %199 = arith.mulf %194, %198 : vector<8x8xf32>
    %cst_87 = arith.constant dense<0.000000e+00> : vector<8x32xf32>
    %200 = tpu.matmul %199, %27, %cst_87 {dimension_numbers = #tpu.dot_dimension_numbers<[1], [0], [0], [1], [0, 0, 1, 1], [], []>} : vector<8x8xf32>, vector<8x32xf32>, vector<8x32xf32> -> vector<8x32xf32>
    %201 = vector.broadcast %6 : vector<1x32xf32> to vector<8x32xf32>
    %202 = arith.addf %200, %201 : vector<8x32xf32>
    %203 = tpu.concatenate %181, %199 in 0 : vector<8x8xf32>, vector<8x8xf32> -> vector<16x8xf32>
    %204 = tpu.concatenate %184, %202 in 0 : vector<8x32xf32>, vector<8x32xf32> -> vector<16x32xf32>
    %205 = arith.addf %166, %204 : vector<16x32xf32>
    %cst_88 = arith.constant 0.707106769 : f32
    %206 = vector.broadcast %cst_88 : f32 to vector<16x32xf32>
    %207 = arith.mulf %205, %206 : vector<16x32xf32>
    %208 = arith.addf %207, %127 : vector<16x32xf32>
    %cst_89 = arith.constant 0.707106769 : f32
    %209 = vector.broadcast %cst_89 : f32 to vector<16x32xf32>
    %210 = arith.mulf %208, %209 : vector<16x32xf32>
    %cst_90 = arith.constant dense<0.000000e+00> : vector<16x16xf32>
    %211 = tpu.matmul %210, %4, %cst_90 {dimension_numbers = #tpu.dot_dimension_numbers<[1], [0], [0], [1], [0, 0, 1, 1], [], []>} : vector<16x32xf32>, vector<32x16xf32>, vector<16x16xf32> -> vector<16x16xf32>
    %212 = vector.broadcast %8 : vector<1x16xf32> to vector<16x16xf32>
    %213 = arith.addf %211, %212 : vector<16x16xf32>
    %cst_91 = arith.constant 0.000000e+00 : f32
    %214 = vector.broadcast %cst_91 : f32 to vector<16x104xf32>
    %215 = tpu.concatenate %213, %203, %214 in 1 : vector<16x16xf32>, vector<16x8xf32>, vector<16x104xf32> -> vector<16x128xf32>
    %c0_92 = arith.constant 0 : index
    %c0_93 = arith.constant 0 : index
    %216 = vector.load %arg7[%c0_92, %c0_93] : memref<16x128xf32, #tpu.memory_space<vmem>>, vector<16x128xf32>
    tpu.vector_store %arg7[%c0_92, %c0_93], %215 {strides = array<i32>} : memref<16x128xf32, #tpu.memory_space<vmem>>, vector<16x128xf32>,
    return
  }
  func.func @transform_0(%arg0: i32) -> (i32, i32) {
    %c0_i32 = arith.constant 0 : i32
    %c0_i32_0 = arith.constant 0 : i32
    %c0_i32_1 = arith.constant 0 : i32
    return %c0_i32, %c0_i32_0 : i32, i32
  }
  func.func @transform_1(%arg0: i32) -> (i32, i32) {
    %c0_i32 = arith.constant 0 : i32
    %c0_i32_0 = arith.constant 0 : i32
    %c0_i32_1 = arith.constant 0 : i32
    return %c0_i32, %c0_i32_0 : i32, i32
  }
  func.func @transform_2(%arg0: i32) -> (i32, i32, i32) {
    %c0_i32 = arith.constant 0 : i32
    %c0_i32_0 = arith.constant 0 : i32
    %c0_i32_1 = arith.constant 0 : i32
    %c0_i32_2 = arith.constant 0 : i32
    return %c0_i32, %c0_i32_0, %c0_i32_1 : i32, i32, i32
  }
  func.func @transform_3(%arg0: i32) -> (i32, i32) {
    %c0_i32 = arith.constant 0 : i32
    %c0_i32_0 = arith.constant 0 : i32
    %c0_i32_1 = arith.constant 0 : i32
    return %c0_i32, %c0_i32_0 : i32, i32
  }
  func.func @transform_4(%arg0: i32) -> (i32, i32) {
    %c0_i32 = arith.constant 0 : i32
    %c0_i32_0 = arith.constant 0 : i32
    %c0_i32_1 = arith.constant 0 : i32
    return %c0_i32, %c0_i32_0 : i32, i32
  }
  func.func @transform_5(%arg0: i32) -> (i32, i32) {
    %c0_i32 = arith.constant 0 : i32
    %c0_i32_0 = arith.constant 0 : i32
    %c0_i32_1 = arith.constant 0 : i32
    return %c0_i32, %c0_i32_0 : i32, i32
  }
  func.func @transform_6(%arg0: i32) -> (i32, i32) {
    %c0_i32 = arith.constant 0 : i32
    %c0_i32_0 = arith.constant 0 : i32
    %c0_i32_1 = arith.constant 0 : i32
    return %c0_i32, %c0_i32_0 : i32, i32
  }
}

</mosaic_0001>

<llo_original>
// kernel: tpu_custom_call.1
$region0: #{tpu_custom_call.1}
  #allocation0 [shape = 'u32[]', space=smem, size = 0x4, offset = 0x4, fixed_abs, tag = 'smem constant byte address 0x4 - core index']
  #allocation1 [shape = 'u32[144,128]{1,0:T(1,128)}', space=vmem, size = 0x12000, scoped, tag = 'internal scratch']
  %s0 = inlined_call_operand.hbm [shape: f32[16,64], index: 0, kind: input, shape index: {}]
  %s1 = inlined_call_operand.hbm [shape: f32[16,128], index: 1, kind: input, shape index: {}]
  %s2 = inlined_call_operand.hbm [shape: f32[6,32,64], index: 2, kind: input, shape index: {}]
  %s3 = inlined_call_operand.hbm [shape: f32[64,64], index: 3, kind: input, shape index: {}]
  %s4 = inlined_call_operand.hbm [shape: f32[32,80], index: 4, kind: input, shape index: {}]
  %s5 = inlined_call_operand.vmem [shape: f32[8,64], index: 5, kind: input, shape index: {}]
  %s6 = inlined_call_operand.hbm [shape: f32[16,128], index: 6, kind: output, shape index: {}]
  %s7 = sld [smem:[#allocation0]]
  $region54: #{tpu_custom_call.1} parent=0
    _
  %s9 = ssub.s32 1, %s7
  %s10 = scalar_select 0, %s9, %s7
  $region1: #{tpu_custom_call.1} parent=0
    #allocation2 [shape = 'u8[8192]{0}', space=vmem, size = 0x2000, scoped, tag = 'input window, operand 0, single buffered']
    #allocation3 [shape = 's32[1]{0}', space=sflag, size = 0x4, scoped, tag = 'scoped memory for tpu_custom_call.1']
    #allocation4 [shape = 's32[1]{0}', space=sflag, size = 0x4, scoped, tag = 'scoped memory for tpu_custom_call.1']
    #allocation5 [shape = 'u8[8192]{0}', space=vmem, size = 0x2000, scoped, tag = 'input window, operand 1, single buffered']
    #allocation6 [shape = 's32[1]{0}', space=sflag, size = 0x4, scoped, tag = 'scoped memory for tpu_custom_call.1']
    #allocation7 [shape = 'u8[98304]{0}', space=vmem, size = 0x18000, scoped, tag = 'input window, operand 2, single buffered']
    #allocation8 [shape = 'u8[32768]{0}', space=vmem, size = 0x8000, scoped, tag = 'input window, operand 3, single buffered']
    #allocation9 [shape = 's32[1]{0}', space=sflag, size = 0x4, scoped, tag = 'scoped memory for tpu_custom_call.1']
    #allocation10 [shape = 'u8[16384]{0}', space=vmem, size = 0x4000, scoped, tag = 'input window, operand 4, single buffered']
    #allocation11 [shape = 'u8[8192]{0}', space=vmem, size = 0x2000, scoped, tag = 'output window, operand 0, single buffered']
    %11 = vsyncpa [#allocation3], 0
    %12 = vsyncpa [#allocation6], 0
    %13 = vsyncpa [#allocation9], 0
    %14 = vsyncpa [#allocation4], 0
    // Predicated region
    $region2: #{tpu_custom_call.1} parent=1 // pred_check
      _
    $region3: #{tpu_custom_call.1} parent=1 // pred_check_branch
      %16 = sbr.rel (0) target = $region5
    $region4: #{tpu_custom_call.1} parent=1 // pred_region
      %s18 = ssub.s32 256, 256
      %19 = vsyncadd [#allocation3], %s18
      %s20 = sshll.u32 [#allocation2], 4
      %s21 = int_to_ptr.vmem [resolvable:$true] %s20
      %26 = dma.hbm_to_vmem [thread:$0]  %s0, 256, %s21, [#allocation3], 128, 128, 8
    $region5: #{tpu_custom_call.1} parent=1 // pred_fallthru
      _
    // Predicated region
    $region6: #{tpu_custom_call.1} parent=1 // pred_check
      _
    $region7: #{tpu_custom_call.1} parent=1 // pred_check_branch
      %28 = sbr.rel (0) target = $region9
    $region8: #{tpu_custom_call.1} parent=1 // pred_region
      %s30 = ssub.s32 256, 256
      %31 = vsyncadd [#allocation6], %s30
      %s32 = sshll.u32 [#allocation5], 4
      %s33 = int_to_ptr.vmem [resolvable:$true] %s32
      %38 = dma.hbm_to_vmem [thread:$0]  %s1, 256, %s33, [#allocation6], 128, 128, 8
    $region9: #{tpu_custom_call.1} parent=1 // pred_fallthru
      _
    // Predicated region
    $region10: #{tpu_custom_call.1} parent=1 // pred_check
      _
    $region11: #{tpu_custom_call.1} parent=1 // pred_check_branch
      %40 = sbr.rel (0) target = $region13
    $region12: #{tpu_custom_call.1} parent=1 // pred_region
      %s42 = ssub.s32 3072, 3072
      %43 = vsyncadd [#allocation6], %s42
      %s44 = sshll.u32 [#allocation7], 4
      %s45 = int_to_ptr.vmem [resolvable:$true] %s44
      %50 = dma.hbm_to_vmem [thread:$0]  %s2, 3072, %s45, [#allocation6], 128, 128, 8
    $region13: #{tpu_custom_call.1} parent=1 // pred_fallthru
      _
    // Predicated region
    $region14: #{tpu_custom_call.1} parent=1 // pred_check
      _
    $region15: #{tpu_custom_call.1} parent=1 // pred_check_branch
      %52 = sbr.rel (0) target = $region17
    $region16: #{tpu_custom_call.1} parent=1 // pred_region
      %s54 = ssub.s32 1024, 1024
      %55 = vsyncadd [#allocation9], %s54
      %s56 = sshll.u32 [#allocation8], 4
      %s57 = int_to_ptr.vmem [resolvable:$true] %s56
      %62 = dma.hbm_to_vmem [thread:$0]  %s3, 1024, %s57, [#allocation9], 128, 128, 8
    $region17: #{tpu_custom_call.1} parent=1 // pred_fallthru
      _
    // Predicated region
    $region18: #{tpu_custom_call.1} parent=1 // pred_check
      _
    $region19: #{tpu_custom_call.1} parent=1 // pred_check_branch
      %64 = sbr.rel (0) target = $region21
    $region20: #{tpu_custom_call.1} parent=1 // pred_region
      %s66 = ssub.s32 512, 512
      %67 = vsyncadd [#allocation9], %s66
      %s68 = sshll.u32 [#allocation10], 4
      %s69 = int_to_ptr.vmem [resolvable:$true] %s68
      %74 = dma.hbm_to_vmem [thread:$0]  %s4, 512, %s69, [#allocation9], 128, 128, 8
    $region21: #{tpu_custom_call.1} parent=1 // pred_fallthru
      _
    // Predicated region
    $region22: #{tpu_custom_call.1} parent=1 // pred_check
      _
    $region23: #{tpu_custom_call.1} parent=1 // pred_check_branch
      %76 = sbr.rel (0) target = $region25
    $region24: #{tpu_custom_call.1} parent=1 // pred_region
      _
    $region25: #{tpu_custom_call.1} parent=1 // pred_fallthru
      _
    // Predicated region
    $region26: #{tpu_custom_call.1} parent=1 // pred_check
      _
    $region27: #{tpu_custom_call.1} parent=1 // pred_check_branch
      %78 = sbr.rel (0) target = $region29
    $region28: #{tpu_custom_call.1} parent=1 // pred_region
      %79 = dma.done [#allocation3], 256
    $region29: #{tpu_custom_call.1} parent=1 // pred_fallthru
      _
    // Predicated region
    $region30: #{tpu_custom_call.1} parent=1 // pred_check
      _
    $region31: #{tpu_custom_call.1} parent=1 // pred_check_branch
      %81 = sbr.rel (0) target = $region33
    $region32: #{tpu_custom_call.1} parent=1 // pred_region
      %82 = dma.done [#allocation6], 256
    $region33: #{tpu_custom_call.1} parent=1 // pred_fallthru
      _
    // Predicated region
    $region34: #{tpu_custom_call.1} parent=1 // pred_check
      _
    $region35: #{tpu_custom_call.1} parent=1 // pred_check_branch
      %84 = sbr.rel (0) target = $region37
    $region36: #{tpu_custom_call.1} parent=1 // pred_region
      %85 = dma.done [#allocation6], 3072
    $region37: #{tpu_custom_call.1} parent=1 // pred_fallthru
      _
    // Predicated region
    $region38: #{tpu_custom_call.1} parent=1 // pred_check
      _
    $region39: #{tpu_custom_call.1} parent=1 // pred_check_branch
      %87 = sbr.rel (0) target = $region41
    $region40: #{tpu_custom_call.1} parent=1 // pred_region
      %88 = dma.done [#allocation9], 1024
    $region41: #{tpu_custom_call.1} parent=1 // pred_fallthru
      _
    // Predicated region
    $region42: #{tpu_custom_call.1} parent=1 // pred_check
      _
    $region43: #{tpu_custom_call.1} parent=1 // pred_check_branch
      %90 = sbr.rel (0) target = $region45
    $region44: #{tpu_custom_call.1} parent=1 // pred_region
      %91 = dma.done [#allocation9], 512
    $region45: #{tpu_custom_call.1} parent=1 // pred_fallthru
      _
    %v92 = vld [vmem:[#allocation2] sm:$0xff]
    %v93 = vld [vmem:[#allocation2 + $0x8] sm:$0xff]
    %v94 = vld [vmem:[#allocation8] sm:$0xff]
    %v95 = vld [vmem:[#allocation8 + $0x8] sm:$0xff]
    %v96 = vld [vmem:[#allocation8 + $0x10] sm:$0xff]
    %v97 = vld [vmem:[#allocation8 + $0x18] sm:$0xff]
    %v98 = vld [vmem:[#allocation8 + $0x20] sm:$0xff]
    %v99 = vld [vmem:[#allocation8 + $0x28] sm:$0xff]
    %v100 = vld [vmem:[#allocation8 + $0x30] sm:$0xff]
    %v101 = vld [vmem:[#allocation8 + $0x38] sm:$0xff]
    %v102 = vld [vmem:[#allocation10] sm:$0xff]
    %v103 = vld [vmem:[#allocation10 + $0x8] sm:$0xff]
    %v104 = vld [vmem:[#allocation10 + $0x10] sm:$0xff]
    %v105 = vld [vmem:[#allocation10 + $0x18] sm:$0xff]
    %v106 = vld [vmem:[%s5] sm:$0x1]
    %v107 = vld [vmem:[%s5 + $0x1] sm:$0x1]
    %v108 = vld [vmem:[%s5 + $0x2] sm:$0x1]
    %v109 = vld [vmem:[%s5 + $0x3] sm:$0x1]
    %v110 = vlaneseq
    %v111 = vshrl.u32 %v110, 7
    %v112 = vsub.s32 0, %v111
    %v113 = vrot.slane %v106, %v112
    %vm114 = vcmask 523264
    %v116 = vsel %vm114, %v92, 0
    %v119 = vsel %vm114, %v93, 0
    %121 = vmatprep.subr.mxu0 0.0
    %122 = vmatpush1.msra.mxu0 %v94
    %123 = vmatprep.subr.mxu0 0.0
    %124 = vmatpush1.msra.mxu0 %v95
    %125 = vmatprep.subr.mxu0 0.0
    %126 = vmatpush1.msra.mxu0 %v96
    %127 = vmatprep.subr.mxu0 0.0
    %128 = vmatpush1.msra.mxu0 %v97
    %129 = vmatprep.subr.mxu0 0.0
    %130 = vmatpush1.msra.mxu0 %v98
    %131 = vmatprep.subr.mxu0 0.0
    %132 = vmatpush1.msra.mxu0 %v99
    %133 = vmatprep.subr.mxu0 0.0
    %134 = vmatpush1.msra.mxu0 %v100
    %135 = vmatprep.subr.mxu0 0.0
    %136 = vmatpush1.msra.mxu0 %v101
    %137 = vmatprep.subr.mxu0 0.0
    %138 = vmatpush1.msra.mxu0 0.0
    %139 = vmatprep.subr.mxu0 0.0
    %140 = vmatpush1.msra.mxu0 0.0
    %141 = vmatprep.subr.mxu0 0.0
    %142 = vmatpush1.msra.mxu0 0.0
    %143 = vmatprep.subr.mxu0 0.0
    %144 = vmatpush1.msra.mxu0 0.0
    %145 = vmatprep.subr.mxu0 0.0
    %146 = vmatpush1.msra.mxu0 0.0
    %147 = vmatprep.subr.mxu0 0.0
    %148 = vmatpush1.msra.mxu0 0.0
    %149 = vmatprep.subr.mxu0 0.0
    %150 = vmatpush1.msra.mxu0 0.0
    %151 = vmatprep.subr.mxu0 0.0
    %152 = vmatpush1.msra.mxu0 0.0
    %153 = vmatprep.subr.mxu0 0.0
    %154 = vmatpush1.msra.mxu0 0.0
    %155 = vmatprep.subr.mxu0 0.0
    %156 = vmatpush1.msra.mxu0 0.0
    %157 = vmatprep.subr.mxu0 0.0
    %158 = vmatpush1.msra.mxu0 0.0
    %159 = vmatprep.subr.mxu0 0.0
    %160 = vmatpush1.msra.mxu0 0.0
    %161 = vmatprep.subr.mxu0 0.0
    %162 = vmatpush1.msra.mxu0 0.0
    %163 = vmatprep.subr.mxu0 0.0
    %164 = vmatpush1.msra.mxu0 0.0
    %165 = vmatprep.subr.mxu0 0.0
    %166 = vmatpush1.msra.mxu0 0.0
    %167 = vmatprep.subr.mxu0 0.0
    %168 = vmatpush1.msra.mxu0 0.0
    %169 = vmatprep.subr.mxu0 0.0
    %170 = vmatpush1.msra.mxu0 0.0
    %171 = vmatprep.subr.mxu0 0.0
    %172 = vmatpush1.msra.mxu0 0.0
    %173 = vmatprep.subr.mxu0 0.0
    %174 = vmatpush1.msra.mxu0 0.0
    %175 = vmatprep.subr.mxu0 0.0
    %176 = vmatpush1.msra.mxu0 0.0
    %177 = vmatprep.subr.mxu0 0.0
    %178 = vmatpush1.msra.mxu0 0.0
    %179 = vmatprep.subr.mxu0 0.0
    %180 = vmatpush1.msra.mxu0 0.0
    %181 = vmatprep.subr.mxu0 0.0
    %182 = vmatpush1.msra.mxu0 0.0
    %183 = vmatprep.subr.mxu0 0.0
    %184 = vmatpush1.msra.mxu0 0.0
    %185 = vmatprep.mubr.f32.mxu0 0.0
    %186 = vmatmul.mubr.f32.gmra.mrb[0].mxu0 %v116
    %v187 = vpop.f32.mrb[0].mxu0
    %v188 = vadd.f32 %v113, %v187
    %v189 = vpop.f32.mrb[0].mxu0
    %190 = vmatprep.mubr.f32.mxu0 0.0
    %191 = vmatmul.mubr.f32.gmra.mrb[0].mxu0 %v119
    %v192 = vpop.f32.mrb[0].mxu0
    %v193 = vadd.f32 %v113, %v192
    %v194 = vpop.f32.mrb[0].mxu0
    %195 = vdwg.mxu0
    %v196 = vld [vmem:[#allocation5] sm:$0xff]
    %v198 = vsel %vm114, %v102, 0
    %v201 = vsel %vm114, %v103, 0
    %v204 = vsel %vm114, %v104, 0
    %v207 = vsel %vm114, %v105, 0
    %v210 = vsel %vm114, %v196, 0
    %212 = vmatprep.subr.mxu0 0.0
    %213 = vmatpush1.xpose.msra.mxu0 %v210
    %214 = vmatprep.subr.mxu0 0.0
    %215 = vmatpush1.xpose.msra.mxu0 0.0
    %216 = vmatprep.subr.mxu0 0.0
    %217 = vmatpush1.xpose.msra.mxu0 0.0
    %218 = vmatprep.subr.mxu0 0.0
    %219 = vmatpush1.xpose.msra.mxu0 0.0
    %220 = vmatprep.subr.mxu0 0.0
    %221 = vmatpush1.xpose.msra.mxu0 0.0
    %222 = vmatprep.subr.mxu0 0.0
    %223 = vmatpush1.xpose.msra.mxu0 0.0
    %224 = vmatprep.subr.mxu0 0.0
    %225 = vmatpush1.xpose.msra.mxu0 0.0
    %226 = vmatprep.subr.mxu0 0.0
    %227 = vmatpush1.xpose.msra.mxu0 0.0
    %228 = vmatprep.subr.mxu0 0.0
    %229 = vmatpush1.xpose.msra.mxu0 0.0
    %230 = vmatprep.subr.mxu0 0.0
    %231 = vmatpush1.xpose.msra.mxu0 0.0
    %232 = vmatprep.subr.mxu0 0.0
    %233 = vmatpush1.xpose.msra.mxu0 0.0
    %234 = vmatprep.subr.mxu0 0.0
    %235 = vmatpush1.xpose.msra.mxu0 0.0
    %236 = vmatprep.subr.mxu0 0.0
    %237 = vmatpush1.xpose.msra.mxu0 0.0
    %238 = vmatprep.subr.mxu0 0.0
    %239 = vmatpush1.xpose.msra.mxu0 0.0
    %240 = vmatprep.subr.mxu0 0.0
    %241 = vmatpush1.xpose.msra.mxu0 0.0
    %242 = vmatprep.subr.mxu0 0.0
    %243 = vmatpush1.xpose.msra.mxu0 0.0
    %244 = vmatprep.subr.mxu0 0.0
    %245 = vmatpush1.xpose.msra.mxu0 0.0
    %246 = vmatprep.subr.mxu0 0.0
    %247 = vmatpush1.xpose.msra.mxu0 0.0
    %248 = vmatprep.subr.mxu0 0.0
    %249 = vmatpush1.xpose.msra.mxu0 0.0
    %250 = vmatprep.subr.mxu0 0.0
    %251 = vmatpush1.xpose.msra.mxu0 0.0
    %252 = vmatprep.subr.mxu0 0.0
    %253 = vmatpush1.xpose.msra.mxu0 0.0
    %254 = vmatprep.subr.mxu0 0.0
    %255 = vmatpush1.xpose.msra.mxu0 0.0
    %256 = vmatprep.subr.mxu0 0.0
    %257 = vmatpush1.xpose.msra.mxu0 0.0
    %258 = vmatprep.subr.mxu0 0.0
    %259 = vmatpush1.xpose.msra.mxu0 0.0
    %260 = vmatprep.subr.mxu0 0.0
    %261 = vmatpush1.xpose.msra.mxu0 0.0
    %262 = vmatprep.subr.mxu0 0.0
    %263 = vmatpush1.xpose.msra.mxu0 0.0
    %264 = vmatprep.subr.mxu0 0.0
    %265 = vmatpush1.xpose.msra.mxu0 0.0
    %266 = vmatprep.subr.mxu0 0.0
    %267 = vmatpush1.xpose.msra.mxu0 0.0
    %268 = vmatprep.subr.mxu0 0.0
    %269 = vmatpush1.xpose.msra.mxu0 0.0
    %270 = vmatprep.subr.mxu0 0.0
    %271 = vmatpush1.xpose.msra.mxu0 0.0
    %272 = vmatprep.subr.mxu0 0.0
    %273 = vmatpush1.xpose.msra.mxu0 0.0
    %274 = vmatprep.subr.mxu0 0.0
    %275 = vmatpush1.xpose.msra.mxu0 0.0
    %276 = vmatprep.mubr.f32.mxu0 0.0
    %277 = vmatmul.mubr.f32.gmra.mrb[0].mxu0 %v198
    %v278 = vpop.f32.mrb[0].mxu0
    %v279 = vadd.f32 0.0, %v278
    %v280 = vpop.f32.mrb[0].mxu0
    %281 = vmatprep.mubr.f32.mxu0 0.0
    %282 = vmatmul.mubr.f32.gmra.mrb[0].mxu0 %v201
    %v283 = vpop.f32.mrb[0].mxu0
    %v284 = vadd.f32 0.0, %v283
    %v285 = vpop.f32.mrb[0].mxu0
    %286 = vmatprep.mubr.f32.mxu0 0.0
    %287 = vmatmul.mubr.f32.gmra.mrb[0].mxu0 %v204
    %v288 = vpop.f32.mrb[0].mxu0
    %v289 = vadd.f32 0.0, %v288
    %v290 = vpop.f32.mrb[0].mxu0
    %291 = vmatprep.mubr.f32.mxu0 0.0
    %292 = vmatmul.mubr.f32.gmra.mrb[0].mxu0 %v207
    %v293 = vpop.f32.mrb[0].mxu0
    %v294 = vadd.f32 0.0, %v293
    %v295 = vpop.f32.mrb[0].mxu0
    %296 = vdwg.mxu0
    %v297 = vlaneseq
    %v298 = vshrl.u32 %v297, 7
    %v299 = vsub.s32 0, %v298
    %v300 = vrot.slane %v108, %v299
    %v301 = vadd.f32 %v92, %v300
    %v303 = vsel %vm114, %v301, 0
    %305 = vmatprep.subr.mxu0 0.0
    %306 = vmatpush1.xpose.msra.mxu0 %v210
    %307 = vmatprep.subr.mxu0 0.0
    %308 = vmatpush1.xpose.msra.mxu0 0.0
    %309 = vmatprep.subr.mxu0 0.0
    %310 = vmatpush1.xpose.msra.mxu0 0.0
    %311 = vmatprep.subr.mxu0 0.0
    %312 = vmatpush1.xpose.msra.mxu0 0.0
    %313 = vmatprep.subr.mxu0 0.0
    %314 = vmatpush1.xpose.msra.mxu0 0.0
    %315 = vmatprep.subr.mxu0 0.0
    %316 = vmatpush1.xpose.msra.mxu0 0.0
    %317 = vmatprep.subr.mxu0 0.0
    %318 = vmatpush1.xpose.msra.mxu0 0.0
    %319 = vmatprep.subr.mxu0 0.0
    %320 = vmatpush1.xpose.msra.mxu0 0.0
    %321 = vmatprep.subr.mxu0 0.0
    %322 = vmatpush1.xpose.msra.mxu0 0.0
    %323 = vmatprep.subr.mxu0 0.0
    %324 = vmatpush1.xpose.msra.mxu0 0.0
    %325 = vmatprep.subr.mxu0 0.0
    %326 = vmatpush1.xpose.msra.mxu0 0.0
    %327 = vmatprep.subr.mxu0 0.0
    %328 = vmatpush1.xpose.msra.mxu0 0.0
    %329 = vmatprep.subr.mxu0 0.0
    %330 = vmatpush1.xpose.msra.mxu0 0.0
    %331 = vmatprep.subr.mxu0 0.0
    %332 = vmatpush1.xpose.msra.mxu0 0.0
    %333 = vmatprep.subr.mxu0 0.0
    %334 = vmatpush1.xpose.msra.mxu0 0.0
    %335 = vmatprep.subr.mxu0 0.0
    %336 = vmatpush1.xpose.msra.mxu0 0.0
    %337 = vmatprep.subr.mxu0 0.0
    %338 = vmatpush1.xpose.msra.mxu0 0.0
    %339 = vmatprep.subr.mxu0 0.0
    %340 = vmatpush1.xpose.msra.mxu0 0.0
    %341 = vmatprep.subr.mxu0 0.0
    %342 = vmatpush1.xpose.msra.mxu0 0.0
    %343 = vmatprep.subr.mxu0 0.0
    %344 = vmatpush1.xpose.msra.mxu0 0.0
    %345 = vmatprep.subr.mxu0 0.0
    %346 = vmatpush1.xpose.msra.mxu0 0.0
    %347 = vmatprep.subr.mxu0 0.0
    %348 = vmatpush1.xpose.msra.mxu0 0.0
    %349 = vmatprep.subr.mxu0 0.0
    %350 = vmatpush1.xpose.msra.mxu0 0.0
    %351 = vmatprep.subr.mxu0 0.0
    %352 = vmatpush1.xpose.msra.mxu0 0.0
    %353 = vmatprep.subr.mxu0 0.0
    %354 = vmatpush1.xpose.msra.mxu0 0.0
    %355 = vmatprep.subr.mxu0 0.0
    %356 = vmatpush1.xpose.msra.mxu0 0.0
    %357 = vmatprep.subr.mxu0 0.0
    %358 = vmatpush1.xpose.msra.mxu0 0.0
    %359 = vmatprep.subr.mxu0 0.0
    %360 = vmatpush1.xpose.msra.mxu0 0.0
    %361 = vmatprep.subr.mxu0 0.0
    %362 = vmatpush1.xpose.msra.mxu0 0.0
    %363 = vmatprep.subr.mxu0 0.0
    %364 = vmatpush1.xpose.msra.mxu0 0.0
    %365 = vmatprep.subr.mxu0 0.0
    %366 = vmatpush1.xpose.msra.mxu0 0.0
    %367 = vmatprep.subr.mxu0 0.0
    %368 = vmatpush1.xpose.msra.mxu0 0.0
    %369 = vmatprep.mubr.f32.mxu0 0.0
    %370 = vmatmul.mubr.f32.gmra.mrb[0].mxu0 %v303
    %v371 = vpop.f32.mrb[0].mxu0
    %v372 = vadd.f32 0.0, %v371
    %v373 = vpop.f32.mrb[0].mxu0
    %374 = vdwg.mxu0
    %375 = vrot.lane.b32.xlu0 %v196, 64
    %v376 = vpop.permute.xlu0 %375
    %385 = vrot.lane.b32.xlu0 %v94, 96
    %v386 = vpop.permute.xlu0 %385
    %387 = vrot.lane.b32.xlu0 %v95, 96
    %v388 = vpop.permute.xlu0 %387
    %389 = vrot.lane.b32.xlu0 %v96, 96
    %v390 = vpop.permute.xlu0 %389
    %391 = vrot.lane.b32.xlu0 %v97, 96
    %v392 = vpop.permute.xlu0 %391
    %393 = vrot.lane.b32.xlu0 %v98, 96
    %v394 = vpop.permute.xlu0 %393
    %395 = vrot.lane.b32.xlu0 %v99, 96
    %v396 = vpop.permute.xlu0 %395
    %397 = vrot.lane.b32.xlu0 %v100, 96
    %v398 = vpop.permute.xlu0 %397
    %399 = vrot.lane.b32.xlu0 %v101, 96
    %v400 = vpop.permute.xlu0 %399
    %v409 = vsel %vm114, %v376, 0
    %411 = vmatprep.subr.mxu0 0.0
    %412 = vmatpush1.msra.mxu0 %v386
    %413 = vmatprep.subr.mxu0 0.0
    %414 = vmatpush1.msra.mxu0 %v388
    %415 = vmatprep.subr.mxu0 0.0
    %416 = vmatpush1.msra.mxu0 %v390
    %417 = vmatprep.subr.mxu0 0.0
    %418 = vmatpush1.msra.mxu0 %v392
    %419 = vmatprep.subr.mxu0 0.0
    %420 = vmatpush1.msra.mxu0 %v394
    %421 = vmatprep.subr.mxu0 0.0
    %422 = vmatpush1.msra.mxu0 %v396
    %423 = vmatprep.subr.mxu0 0.0
    %424 = vmatpush1.msra.mxu0 %v398
    %425 = vmatprep.subr.mxu0 0.0
    %426 = vmatpush1.msra.mxu0 %v400
    %427 = vmatprep.subr.mxu0 0.0
    %428 = vmatpush1.msra.mxu0 0.0
    %429 = vmatprep.subr.mxu0 0.0
    %430 = vmatpush1.msra.mxu0 0.0
    %431 = vmatprep.subr.mxu0 0.0
    %432 = vmatpush1.msra.mxu0 0.0
    %433 = vmatprep.subr.mxu0 0.0
    %434 = vmatpush1.msra.mxu0 0.0
    %435 = vmatprep.subr.mxu0 0.0
    %436 = vmatpush1.msra.mxu0 0.0
    %437 = vmatprep.subr.mxu0 0.0
    %438 = vmatpush1.msra.mxu0 0.0
    %439 = vmatprep.subr.mxu0 0.0
    %440 = vmatpush1.msra.mxu0 0.0
    %441 = vmatprep.subr.mxu0 0.0
    %442 = vmatpush1.msra.mxu0 0.0
    %443 = vmatprep.subr.mxu0 0.0
    %444 = vmatpush1.msra.mxu0 0.0
    %445 = vmatprep.subr.mxu0 0.0
    %446 = vmatpush1.msra.mxu0 0.0
    %447 = vmatprep.subr.mxu0 0.0
    %448 = vmatpush1.msra.mxu0 0.0
    %449 = vmatprep.subr.mxu0 0.0
    %450 = vmatpush1.msra.mxu0 0.0
    %451 = vmatprep.subr.mxu0 0.0
    %452 = vmatpush1.msra.mxu0 0.0
    %453 = vmatprep.subr.mxu0 0.0
    %454 = vmatpush1.msra.mxu0 0.0
    %455 = vmatprep.subr.mxu0 0.0
    %456 = vmatpush1.msra.mxu0 0.0
    %457 = vmatprep.subr.mxu0 0.0
    %458 = vmatpush1.msra.mxu0 0.0
    %459 = vmatprep.subr.mxu0 0.0
    %460 = vmatpush1.msra.mxu0 0.0
    %461 = vmatprep.subr.mxu0 0.0
    %462 = vmatpush1.msra.mxu0 0.0
    %463 = vmatprep.subr.mxu0 0.0
    %464 = vmatpush1.msra.mxu0 0.0
    %465 = vmatprep.subr.mxu0 0.0
    %466 = vmatpush1.msra.mxu0 0.0
    %467 = vmatprep.subr.mxu0 0.0
    %468 = vmatpush1.msra.mxu0 0.0
    %469 = vmatprep.subr.mxu0 0.0
    %470 = vmatpush1.msra.mxu0 0.0
    %471 = vmatprep.subr.mxu0 0.0
    %472 = vmatpush1.msra.mxu0 0.0
    %473 = vmatprep.subr.mxu0 0.0
    %474 = vmatpush1.msra.mxu0 0.0
    %475 = vmatprep.mubr.f32.mxu0 0.0
    %476 = vmatmul.mubr.f32.gmra.mrb[0].mxu0 %v409
    %v477 = vpop.f32.mrb[0].mxu0
    %v478 = vadd.f32 0.0, %v477
    %v479 = vpop.f32.mrb[0].mxu0
    %480 = vdwg.mxu0
    %v481 = vld [vmem:[#allocation5 + $0x8] sm:$0xff]
    %v483 = vsel %vm114, %v481, 0
    %485 = vmatprep.subr.mxu0 0.0
    %486 = vmatpush1.xpose.msra.mxu0 %v483
    %487 = vmatprep.subr.mxu0 0.0
    %488 = vmatpush1.xpose.msra.mxu0 0.0
    %489 = vmatprep.subr.mxu0 0.0
    %490 = vmatpush1.xpose.msra.mxu0 0.0
    %491 = vmatprep.subr.mxu0 0.0
    %492 = vmatpush1.xpose.msra.mxu0 0.0
    %493 = vmatprep.subr.mxu0 0.0
    %494 = vmatpush1.xpose.msra.mxu0 0.0
    %495 = vmatprep.subr.mxu0 0.0
    %496 = vmatpush1.xpose.msra.mxu0 0.0
    %497 = vmatprep.subr.mxu0 0.0
    %498 = vmatpush1.xpose.msra.mxu0 0.0
    %499 = vmatprep.subr.mxu0 0.0
    %500 = vmatpush1.xpose.msra.mxu0 0.0
    %501 = vmatprep.subr.mxu0 0.0
    %502 = vmatpush1.xpose.msra.mxu0 0.0
    %503 = vmatprep.subr.mxu0 0.0
    %504 = vmatpush1.xpose.msra.mxu0 0.0
    %505 = vmatprep.subr.mxu0 0.0
    %506 = vmatpush1.xpose.msra.mxu0 0.0
    %507 = vmatprep.subr.mxu0 0.0
    %508 = vmatpush1.xpose.msra.mxu0 0.0
    %509 = vmatprep.subr.mxu0 0.0
    %510 = vmatpush1.xpose.msra.mxu0 0.0
    %511 = vmatprep.subr.mxu0 0.0
    %512 = vmatpush1.xpose.msra.mxu0 0.0
    %513 = vmatprep.subr.mxu0 0.0
    %514 = vmatpush1.xpose.msra.mxu0 0.0
    %515 = vmatprep.subr.mxu0 0.0
    %516 = vmatpush1.xpose.msra.mxu0 0.0
    %517 = vmatprep.subr.mxu0 0.0
    %518 = vmatpush1.xpose.msra.mxu0 0.0
    %519 = vmatprep.subr.mxu0 0.0
    %520 = vmatpush1.xpose.msra.mxu0 0.0
    %521 = vmatprep.subr.mxu0 0.0
    %522 = vmatpush1.xpose.msra.mxu0 0.0
    %523 = vmatprep.subr.mxu0 0.0
    %524 = vmatpush1.xpose.msra.mxu0 0.0
    %525 = vmatprep.subr.mxu0 0.0
    %526 = vmatpush1.xpose.msra.mxu0 0.0
    %527 = vmatprep.subr.mxu0 0.0
    %528 = vmatpush1.xpose.msra.mxu0 0.0
    %529 = vmatprep.subr.mxu0 0.0
    %530 = vmatpush1.xpose.msra.mxu0 0.0
    %531 = vmatprep.subr.mxu0 0.0
    %532 = vmatpush1.xpose.msra.mxu0 0.0
    %533 = vmatprep.subr.mxu0 0.0
    %534 = vmatpush1.xpose.msra.mxu0 0.0
    %535 = vmatprep.subr.mxu0 0.0
    %536 = vmatpush1.xpose.msra.mxu0 0.0
    %537 = vmatprep.subr.mxu0 0.0
    %538 = vmatpush1.xpose.msra.mxu0 0.0
    %539 = vmatprep.subr.mxu0 0.0
    %540 = vmatpush1.xpose.msra.mxu0 0.0
    %541 = vmatprep.subr.mxu0 0.0
    %542 = vmatpush1.xpose.msra.mxu0 0.0
    %543 = vmatprep.subr.mxu0 0.0
    %544 = vmatpush1.xpose.msra.mxu0 0.0
    %545 = vmatprep.subr.mxu0 0.0
    %546 = vmatpush1.xpose.msra.mxu0 0.0
    %547 = vmatprep.subr.mxu0 0.0
    %548 = vmatpush1.xpose.msra.mxu0 0.0
    %549 = vmatprep.mubr.f32.mxu0 0.0
    %550 = vmatmul.mubr.f32.gmra.mrb[0].mxu0 %v198
    %v551 = vpop.f32.mrb[0].mxu0
    %v552 = vadd.f32 0.0, %v551
    %v553 = vpop.f32.mrb[0].mxu0
    %554 = vmatprep.mubr.f32.mxu0 0.0
    %555 = vmatmul.mubr.f32.gmra.mrb[0].mxu0 %v201
    %v556 = vpop.f32.mrb[0].mxu0
    %v557 = vadd.f32 0.0, %v556
    %v558 = vpop.f32.mrb[0].mxu0
    %559 = vmatprep.mubr.f32.mxu0 0.0
    %560 = vmatmul.mubr.f32.gmra.mrb[0].mxu0 %v204
    %v561 = vpop.f32.mrb[0].mxu0
    %v562 = vadd.f32 0.0, %v561
    %v563 = vpop.f32.mrb[0].mxu0
    %564 = vmatprep.mubr.f32.mxu0 0.0
    %565 = vmatmul.mubr.f32.gmra.mrb[0].mxu0 %v207
    %v566 = vpop.f32.mrb[0].mxu0
    %v567 = vadd.f32 0.0, %v566
    %v568 = vpop.f32.mrb[0].mxu0
    %569 = vdwg.mxu0
    %v570 = vadd.f32 %v93, %v300
    %v572 = vsel %vm114, %v570, 0
    %574 = vmatprep.subr.mxu0 0.0
    %575 = vmatpush1.xpose.msra.mxu0 %v483
    %576 = vmatprep.subr.mxu0 0.0
    %577 = vmatpush1.xpose.msra.mxu0 0.0
    %578 = vmatprep.subr.mxu0 0.0
    %579 = vmatpush1.xpose.msra.mxu0 0.0
    %580 = vmatprep.subr.mxu0 0.0
    %581 = vmatpush1.xpose.msra.mxu0 0.0
    %582 = vmatprep.subr.mxu0 0.0
    %583 = vmatpush1.xpose.msra.mxu0 0.0
    %584 = vmatprep.subr.mxu0 0.0
    %585 = vmatpush1.xpose.msra.mxu0 0.0
    %586 = vmatprep.subr.mxu0 0.0
    %587 = vmatpush1.xpose.msra.mxu0 0.0
    %588 = vmatprep.subr.mxu0 0.0
    %589 = vmatpush1.xpose.msra.mxu0 0.0
    %590 = vmatprep.subr.mxu0 0.0
    %591 = vmatpush1.xpose.msra.mxu0 0.0
    %592 = vmatprep.subr.mxu0 0.0
    %593 = vmatpush1.xpose.msra.mxu0 0.0
    %594 = vmatprep.subr.mxu0 0.0
    %595 = vmatpush1.xpose.msra.mxu0 0.0
    %596 = vmatprep.subr.mxu0 0.0
    %597 = vmatpush1.xpose.msra.mxu0 0.0
    %598 = vmatprep.subr.mxu0 0.0
    %599 = vmatpush1.xpose.msra.mxu0 0.0
    %600 = vmatprep.subr.mxu0 0.0
    %601 = vmatpush1.xpose.msra.mxu0 0.0
    %602 = vmatprep.subr.mxu0 0.0
    %603 = vmatpush1.xpose.msra.mxu0 0.0
    %604 = vmatprep.subr.mxu0 0.0
    %605 = vmatpush1.xpose.msra.mxu0 0.0
    %606 = vmatprep.subr.mxu0 0.0
    %607 = vmatpush1.xpose.msra.mxu0 0.0
    %608 = vmatprep.subr.mxu0 0.0
    %609 = vmatpush1.xpose.msra.mxu0 0.0
    %610 = vmatprep.subr.mxu0 0.0
    %611 = vmatpush1.xpose.msra.mxu0 0.0
    %612 = vmatprep.subr.mxu0 0.0
    %613 = vmatpush1.xpose.msra.mxu0 0.0
    %614 = vmatprep.subr.mxu0 0.0
    %615 = vmatpush1.xpose.msra.mxu0 0.0
    %616 = vmatprep.subr.mxu0 0.0
    %617 = vmatpush1.xpose.msra.mxu0 0.0
    %618 = vmatprep.subr.mxu0 0.0
    %619 = vmatpush1.xpose.msra.mxu0 0.0
    %620 = vmatprep.subr.mxu0 0.0
    %621 = vmatpush1.xpose.msra.mxu0 0.0
    %622 = vmatprep.subr.mxu0 0.0
    %623 = vmatpush1.xpose.msra.mxu0 0.0
    %624 = vmatprep.subr.mxu0 0.0
    %625 = vmatpush1.xpose.msra.mxu0 0.0
    %626 = vmatprep.subr.mxu0 0.0
    %627 = vmatpush1.xpose.msra.mxu0 0.0
    %628 = vmatprep.subr.mxu0 0.0
    %629 = vmatpush1.xpose.msra.mxu0 0.0
    %630 = vmatprep.subr.mxu0 0.0
    %631 = vmatpush1.xpose.msra.mxu0 0.0
    %632 = vmatprep.subr.mxu0 0.0
    %633 = vmatpush1.xpose.msra.mxu0 0.0
    %634 = vmatprep.subr.mxu0 0.0
    %635 = vmatpush1.xpose.msra.mxu0 0.0
    %636 = vmatprep.subr.mxu0 0.0
    %637 = vmatpush1.xpose.msra.mxu0 0.0
    %638 = vmatprep.mubr.f32.mxu0 0.0
    %639 = vmatmul.mubr.f32.gmra.mrb[0].mxu0 %v572
    %v640 = vpop.f32.mrb[0].mxu0
    %v641 = vadd.f32 0.0, %v640
    %v642 = vpop.f32.mrb[0].mxu0
    %643 = vdwg.mxu0
    %644 = vrot.lane.b32.xlu0 %v481, 64
    %v645 = vpop.permute.xlu0 %644
    %v646 = vsel %vm114, %v645, 0
    %648 = vmatprep.subr.mxu0 0.0
    %649 = vmatpush1.msra.mxu0 %v386
    %650 = vmatprep.subr.mxu0 0.0
    %651 = vmatpush1.msra.mxu0 %v388
    %652 = vmatprep.subr.mxu0 0.0
    %653 = vmatpush1.msra.mxu0 %v390
    %654 = vmatprep.subr.mxu0 0.0
    %655 = vmatpush1.msra.mxu0 %v392
    %656 = vmatprep.subr.mxu0 0.0
    %657 = vmatpush1.msra.mxu0 %v394
    %658 = vmatprep.subr.mxu0 0.0
    %659 = vmatpush1.msra.mxu0 %v396
    %660 = vmatprep.subr.mxu0 0.0
    %661 = vmatpush1.msra.mxu0 %v398
    %662 = vmatprep.subr.mxu0 0.0
    %663 = vmatpush1.msra.mxu0 %v400
    %664 = vmatprep.subr.mxu0 0.0
    %665 = vmatpush1.msra.mxu0 0.0
    %666 = vmatprep.subr.mxu0 0.0
    %667 = vmatpush1.msra.mxu0 0.0
    %668 = vmatprep.subr.mxu0 0.0
    %669 = vmatpush1.msra.mxu0 0.0
    %670 = vmatprep.subr.mxu0 0.0
    %671 = vmatpush1.msra.mxu0 0.0
    %672 = vmatprep.subr.mxu0 0.0
    %673 = vmatpush1.msra.mxu0 0.0
    %674 = vmatprep.subr.mxu0 0.0
    %675 = vmatpush1.msra.mxu0 0.0
    %676 = vmatprep.subr.mxu0 0.0
    %677 = vmatpush1.msra.mxu0 0.0
    %678 = vmatprep.subr.mxu0 0.0
    %679 = vmatpush1.msra.mxu0 0.0
    %680 = vmatprep.subr.mxu0 0.0
    %681 = vmatpush1.msra.mxu0 0.0
    %682 = vmatprep.subr.mxu0 0.0
    %683 = vmatpush1.msra.mxu0 0.0
    %684 = vmatprep.subr.mxu0 0.0
    %685 = vmatpush1.msra.mxu0 0.0
    %686 = vmatprep.subr.mxu0 0.0
    %687 = vmatpush1.msra.mxu0 0.0
    %688 = vmatprep.subr.mxu0 0.0
    %689 = vmatpush1.msra.mxu0 0.0
    %690 = vmatprep.subr.mxu0 0.0
    %691 = vmatpush1.msra.mxu0 0.0
    %692 = vmatprep.subr.mxu0 0.0
    %693 = vmatpush1.msra.mxu0 0.0
    %694 = vmatprep.subr.mxu0 0.0
    %695 = vmatpush1.msra.mxu0 0.0
    %696 = vmatprep.subr.mxu0 0.0
    %697 = vmatpush1.msra.mxu0 0.0
    %698 = vmatprep.subr.mxu0 0.0
    %699 = vmatpush1.msra.mxu0 0.0
    %700 = vmatprep.subr.mxu0 0.0
    %701 = vmatpush1.msra.mxu0 0.0
    %702 = vmatprep.subr.mxu0 0.0
    %703 = vmatpush1.msra.mxu0 0.0
    %704 = vmatprep.subr.mxu0 0.0
    %705 = vmatpush1.msra.mxu0 0.0
    %706 = vmatprep.subr.mxu0 0.0
    %707 = vmatpush1.msra.mxu0 0.0
    %708 = vmatprep.subr.mxu0 0.0
    %709 = vmatpush1.msra.mxu0 0.0
    %710 = vmatprep.subr.mxu0 0.0
    %711 = vmatpush1.msra.mxu0 0.0
    %712 = vmatprep.mubr.f32.mxu0 0.0
    %713 = vmatmul.mubr.f32.gmra.mrb[0].mxu0 %v646
    %v714 = vpop.f32.mrb[0].mxu0
    %v715 = vadd.f32 0.0, %v714
    %v716 = vpop.f32.mrb[0].mxu0
    %717 = vdwg.mxu0
    %v718 = vlaneseq
    %v719 = vshrl.u32 %v718, 7
    %v720 = vadd.s32 %v719, 8
    %vm721 = vcmp.lt.s32.totalorder %v719, 0
    %v722 = vsub.s32 0, %v719
    %v723 = vsel %vm721, %v722, %v719
    %v724 = vshrl.u32 %v723, 3
    %v725 = vand.u32 %v723, 7
    %v726 = vsub.s32 0, %v725
    %v727 = vsel %vm721, %v726, %v725
    %vm728 = vcmp.lt.s32.totalorder %v720, 0
    %v729 = vsub.s32 0, %v720
    %v730 = vsel %vm728, %v729, %v720
    %v731 = vshrl.u32 %v730, 3
    %v732 = vand.u32 %v730, 7
    %v733 = vsub.s32 0, %v732
    %v734 = vsel %vm728, %v733, %v732
    %vm735 = vcmp.ne.s32.totalorder %v727, 0
    %vm736 = vcmp.ne.s32.totalorder %v734, 0
    %vm737 = vcmp.lt.s32.totalorder %v727, 0
    %vm738 = vcmp.lt.s32.totalorder %v734, 0
    %vm739 = vmand %vm737, %vm735
    %vm740 = vmand %vm738, %vm736
    %v741 = vadd.s32 %v727, 8
    %v742 = vadd.s32 %v734, 8
    %v743 = vsel %vm739, %v741, %v727
    %v744 = vsel %vm740, %v742, %v734
    %vm747 = vcmask 1041408
    %v748 = vrot.slane %v188, 6
    %v749 = vrot.slane %v193, 6
    %v750 = vsel %vm747, %v748, %v749
    %v753 = vsel %vm747, 1.0, %v748
    %vm754 = vcmp.lt.s32.totalorder %v743, 2
    %vm755 = vcmp.lt.s32.totalorder %v744, 2
    %v756 = vsel %vm754, 1, 0
    %v757 = vsel %vm755, 1, 0
    %vm758 = vcmp.eq.s32.totalorder %v756, 1
    %vm759 = vcmp.eq.s32.totalorder %v757, 1
    %v760 = vsel %vm758, 1.0, %v753
    %v761 = vsel %vm759, 1.0, %v750
    %v762 = vld [vmem:[#allocation7] sm:$0xff]
    %v763 = vld [vmem:[#allocation7 + $0x8] sm:$0xff]
    %v764 = vld [vmem:[#allocation7 + $0x10] sm:$0xff]
    %v765 = vld [vmem:[#allocation7 + $0x18] sm:$0xff]
    %vm766 = vcmp.lt.s32.totalorder %v743, 1
    %vm767 = vcmp.lt.s32.totalorder %v744, 1
    %v768 = vsel %vm766, 1, 0
    %v769 = vsel %vm767, 1, 0
    %vm770 = vcmp.eq.s32.totalorder %v768, 1
    %vm771 = vcmp.eq.s32.totalorder %v769, 1
    %vm773 = vcmask 1046528
    %v774 = vrot.slane %v753, 1
    %v775 = vrot.slane %v750, 1
    %v776 = vsel %vm773, %v774, %v775
    %v777 = vrot.slane %v749, 1
    %v778 = vsel %vm773, %v775, %v777
    %v781 = vsel %vm770, 1.0, %v776
    %v782 = vsel %vm771, 1.0, %v778
    %s783 = scalar_lea.vmem [#allocation7], 32
    %v784 = vld [vmem:[%s783] sm:$0xff]
    %v785 = vld [vmem:[%s783 + $0x8] sm:$0xff]
    %v786 = vld [vmem:[%s783 + $0x10] sm:$0xff]
    %v787 = vld [vmem:[%s783 + $0x18] sm:$0xff]
    %vm788 = vcmask 261120
    %v790 = vsel %vm788, %v781, 0
    %v793 = vsel %vm788, %v782, 0
    %795 = vmatprep.subr.mxu0 0.0
    %796 = vmatpush1.msra.mxu0 %v784
    %797 = vmatprep.subr.mxu0 0.0
    %798 = vmatpush1.msra.mxu0 %v785
    %799 = vmatprep.subr.mxu0 0.0
    %800 = vmatpush1.msra.mxu0 %v786
    %801 = vmatprep.subr.mxu0 0.0
    %802 = vmatpush1.msra.mxu0 %v787
    %803 = vmatprep.subr.mxu0 0.0
    %804 = vmatpush1.msra.mxu0 0.0
    %805 = vmatprep.subr.mxu0 0.0
    %806 = vmatpush1.msra.mxu0 0.0
    %807 = vmatprep.subr.mxu0 0.0
    %808 = vmatpush1.msra.mxu0 0.0
    %809 = vmatprep.subr.mxu0 0.0
    %810 = vmatpush1.msra.mxu0 0.0
    %811 = vmatprep.subr.mxu0 0.0
    %812 = vmatpush1.msra.mxu0 0.0
    %813 = vmatprep.subr.mxu0 0.0
    %814 = vmatpush1.msra.mxu0 0.0
    %815 = vmatprep.subr.mxu0 0.0
    %816 = vmatpush1.msra.mxu0 0.0
    %817 = vmatprep.subr.mxu0 0.0
    %818 = vmatpush1.msra.mxu0 0.0
    %819 = vmatprep.subr.mxu0 0.0
    %820 = vmatpush1.msra.mxu0 0.0
    %821 = vmatprep.subr.mxu0 0.0
    %822 = vmatpush1.msra.mxu0 0.0
    %823 = vmatprep.subr.mxu0 0.0
    %824 = vmatpush1.msra.mxu0 0.0
    %825 = vmatprep.subr.mxu0 0.0
    %826 = vmatpush1.msra.mxu0 0.0
    %827 = vmatprep.subr.mxu0 0.0
    %828 = vmatpush1.msra.mxu0 0.0
    %829 = vmatprep.subr.mxu0 0.0
    %830 = vmatpush1.msra.mxu0 0.0
    %831 = vmatprep.subr.mxu0 0.0
    %832 = vmatpush1.msra.mxu0 0.0
    %833 = vmatprep.subr.mxu0 0.0
    %834 = vmatpush1.msra.mxu0 0.0
    %835 = vmatprep.subr.mxu0 0.0
    %836 = vmatpush1.msra.mxu0 0.0
    %837 = vmatprep.subr.mxu0 0.0
    %838 = vmatpush1.msra.mxu0 0.0
    %839 = vmatprep.subr.mxu0 0.0
    %840 = vmatpush1.msra.mxu0 0.0
    %841 = vmatprep.subr.mxu0 0.0
    %842 = vmatpush1.msra.mxu0 0.0
    %843 = vmatprep.subr.mxu0 0.0
    %844 = vmatpush1.msra.mxu0 0.0
    %845 = vmatprep.subr.mxu0 0.0
    %846 = vmatpush1.msra.mxu0 0.0
    %847 = vmatprep.subr.mxu0 0.0
    %848 = vmatpush1.msra.mxu0 0.0
    %849 = vmatprep.subr.mxu0 0.0
    %850 = vmatpush1.msra.mxu0 0.0
    %851 = vmatprep.subr.mxu0 0.0
    %852 = vmatpush1.msra.mxu0 0.0
    %853 = vmatprep.subr.mxu0 0.0
    %854 = vmatpush1.msra.mxu0 0.0
    %855 = vmatprep.subr.mxu0 0.0
    %856 = vmatpush1.msra.mxu0 0.0
    %857 = vmatprep.subr.mxu0 0.0
    %858 = vmatpush1.msra.mxu0 0.0
    %859 = vmatprep.mubr.f32.mxu0 0.0
    %860 = vmatmul.mubr.f32.gmra.mrb[0].mxu0 %v790
    %v861 = vpop.f32.mrb[0].mxu0
    %v862 = vadd.f32 0.0, %v861
    %v863 = vpop.f32.mrb[0].mxu0
    %864 = vmatprep.mubr.f32.mxu0 0.0
    %865 = vmatmul.mubr.f32.gmra.mrb[0].mxu0 %v793
    %v866 = vpop.f32.mrb[0].mxu0
    %v867 = vadd.f32 0.0, %v866
    %v868 = vpop.f32.mrb[0].mxu0
    %869 = vdwg.mxu0
    %v871 = vsel %vm788, %v760, 0
    %v874 = vsel %vm788, %v761, 0
    %876 = vmatprep.subr.mxu0 0.0
    %877 = vmatpush1.msra.mxu0 %v762
    %878 = vmatprep.subr.mxu0 0.0
    %879 = vmatpush1.msra.mxu0 %v763
    %880 = vmatprep.subr.mxu0 0.0
    %881 = vmatpush1.msra.mxu0 %v764
    %882 = vmatprep.subr.mxu0 0.0
    %883 = vmatpush1.msra.mxu0 %v765
    %884 = vmatprep.subr.mxu0 0.0
    %885 = vmatpush1.msra.mxu0 0.0
    %886 = vmatprep.subr.mxu0 0.0
    %887 = vmatpush1.msra.mxu0 0.0
    %888 = vmatprep.subr.mxu0 0.0
    %889 = vmatpush1.msra.mxu0 0.0
    %890 = vmatprep.subr.mxu0 0.0
    %891 = vmatpush1.msra.mxu0 0.0
    %892 = vmatprep.subr.mxu0 0.0
    %893 = vmatpush1.msra.mxu0 0.0
    %894 = vmatprep.subr.mxu0 0.0
    %895 = vmatpush1.msra.mxu0 0.0
    %896 = vmatprep.subr.mxu0 0.0
    %897 = vmatpush1.msra.mxu0 0.0
    %898 = vmatprep.subr.mxu0 0.0
    %899 = vmatpush1.msra.mxu0 0.0
    %900 = vmatprep.subr.mxu0 0.0
    %901 = vmatpush1.msra.mxu0 0.0
    %902 = vmatprep.subr.mxu0 0.0
    %903 = vmatpush1.msra.mxu0 0.0
    %904 = vmatprep.subr.mxu0 0.0
    %905 = vmatpush1.msra.mxu0 0.0
    %906 = vmatprep.subr.mxu0 0.0
    %907 = vmatpush1.msra.mxu0 0.0
    %908 = vmatprep.subr.mxu0 0.0
    %909 = vmatpush1.msra.mxu0 0.0
    %910 = vmatprep.subr.mxu0 0.0
    %911 = vmatpush1.msra.mxu0 0.0
    %912 = vmatprep.subr.mxu0 0.0
    %913 = vmatpush1.msra.mxu0 0.0
    %914 = vmatprep.subr.mxu0 0.0
    %915 = vmatpush1.msra.mxu0 0.0
    %916 = vmatprep.subr.mxu0 0.0
    %917 = vmatpush1.msra.mxu0 0.0
    %918 = vmatprep.subr.mxu0 0.0
    %919 = vmatpush1.msra.mxu0 0.0
    %920 = vmatprep.subr.mxu0 0.0
    %921 = vmatpush1.msra.mxu0 0.0
    %922 = vmatprep.subr.mxu0 0.0
    %923 = vmatpush1.msra.mxu0 0.0
    %924 = vmatprep.subr.mxu0 0.0
    %925 = vmatpush1.msra.mxu0 0.0
    %926 = vmatprep.subr.mxu0 0.0
    %927 = vmatpush1.msra.mxu0 0.0
    %928 = vmatprep.subr.mxu0 0.0
    %929 = vmatpush1.msra.mxu0 0.0
    %930 = vmatprep.subr.mxu0 0.0
    %931 = vmatpush1.msra.mxu0 0.0
    %932 = vmatprep.subr.mxu0 0.0
    %933 = vmatpush1.msra.mxu0 0.0
    %934 = vmatprep.subr.mxu0 0.0
    %935 = vmatpush1.msra.mxu0 0.0
    %936 = vmatprep.subr.mxu0 0.0
    %937 = vmatpush1.msra.mxu0 0.0
    %938 = vmatprep.subr.mxu0 0.0
    %939 = vmatpush1.msra.mxu0 0.0
    %940 = vmatprep.mubr.f32.mxu0 0.0
    %941 = vmatmul.mubr.f32.gmra.mrb[0].mxu0 %v871
    %v942 = vpop.f32.mrb[0].mxu0
    %v943 = vadd.f32 %v862, %v942
    %v944 = vpop.f32.mrb[0].mxu0
    %945 = vmatprep.mubr.f32.mxu0 0.0
    %946 = vmatmul.mubr.f32.gmra.mrb[0].mxu0 %v874
    %v947 = vpop.f32.mrb[0].mxu0
    %v948 = vadd.f32 %v867, %v947
    %v949 = vpop.f32.mrb[0].mxu0
    %950 = vdwg.mxu0
    %s951 = scalar_lea.vmem [#allocation7], 64
    %v952 = vld [vmem:[%s951] sm:$0xff]
    %v953 = vld [vmem:[%s951 + $0x8] sm:$0xff]
    %v954 = vld [vmem:[%s951 + $0x10] sm:$0xff]
    %v955 = vld [vmem:[%s951 + $0x18] sm:$0xff]
    %vm956 = vcmask 1045504
    %v957 = vrot.slane %v753, 2
    %v958 = vrot.slane %v750, 2
    %v959 = vsel %vm956, %v957, %v958
    %v960 = vrot.slane %v749, 2
    %v961 = vsel %vm956, %v958, %v960
    %v962 = vsel %vm788, %v959, 0
    %v964 = vsel %vm788, %v961, 0
    %966 = vmatprep.subr.mxu0 0.0
    %967 = vmatpush1.msra.mxu0 %v952
    %968 = vmatprep.subr.mxu0 0.0
    %969 = vmatpush1.msra.mxu0 %v953
    %970 = vmatprep.subr.mxu0 0.0
    %971 = vmatpush1.msra.mxu0 %v954
    %972 = vmatprep.subr.mxu0 0.0
    %973 = vmatpush1.msra.mxu0 %v955
    %974 = vmatprep.subr.mxu0 0.0
    %975 = vmatpush1.msra.mxu0 0.0
    %976 = vmatprep.subr.mxu0 0.0
    %977 = vmatpush1.msra.mxu0 0.0
    %978 = vmatprep.subr.mxu0 0.0
    %979 = vmatpush1.msra.mxu0 0.0
    %980 = vmatprep.subr.mxu0 0.0
    %981 = vmatpush1.msra.mxu0 0.0
    %982 = vmatprep.subr.mxu0 0.0
    %983 = vmatpush1.msra.mxu0 0.0
    %984 = vmatprep.subr.mxu0 0.0
    %985 = vmatpush1.msra.mxu0 0.0
    %986 = vmatprep.subr.mxu0 0.0
    %987 = vmatpush1.msra.mxu0 0.0
    %988 = vmatprep.subr.mxu0 0.0
    %989 = vmatpush1.msra.mxu0 0.0
    %990 = vmatprep.subr.mxu0 0.0
    %991 = vmatpush1.msra.mxu0 0.0
    %992 = vmatprep.subr.mxu0 0.0
    %993 = vmatpush1.msra.mxu0 0.0
    %994 = vmatprep.subr.mxu0 0.0
    %995 = vmatpush1.msra.mxu0 0.0
    %996 = vmatprep.subr.mxu0 0.0
    %997 = vmatpush1.msra.mxu0 0.0
    %998 = vmatprep.subr.mxu0 0.0
    %999 = vmatpush1.msra.mxu0 0.0
    %1000 = vmatprep.subr.mxu0 0.0
    %1001 = vmatpush1.msra.mxu0 0.0
    %1002 = vmatprep.subr.mxu0 0.0
    %1003 = vmatpush1.msra.mxu0 0.0
    %1004 = vmatprep.subr.mxu0 0.0
    %1005 = vmatpush1.msra.mxu0 0.0
    %1006 = vmatprep.subr.mxu0 0.0
    %1007 = vmatpush1.msra.mxu0 0.0
    %1008 = vmatprep.subr.mxu0 0.0
    %1009 = vmatpush1.msra.mxu0 0.0
    %1010 = vmatprep.subr.mxu0 0.0
    %1011 = vmatpush1.msra.mxu0 0.0
    %1012 = vmatprep.subr.mxu0 0.0
    %1013 = vmatpush1.msra.mxu0 0.0
    %1014 = vmatprep.subr.mxu0 0.0
    %1015 = vmatpush1.msra.mxu0 0.0
    %1016 = vmatprep.subr.mxu0 0.0
    %1017 = vmatpush1.msra.mxu0 0.0
    %1018 = vmatprep.subr.mxu0 0.0
    %1019 = vmatpush1.msra.mxu0 0.0
    %1020 = vmatprep.subr.mxu0 0.0
    %1021 = vmatpush1.msra.mxu0 0.0
    %1022 = vmatprep.subr.mxu0 0.0
    %1023 = vmatpush1.msra.mxu0 0.0
    %1024 = vmatprep.subr.mxu0 0.0
    %1025 = vmatpush1.msra.mxu0 0.0
    %1026 = vmatprep.subr.mxu0 0.0
    %1027 = vmatpush1.msra.mxu0 0.0
    %1028 = vmatprep.subr.mxu0 0.0
    %1029 = vmatpush1.msra.mxu0 0.0
    %1030 = vmatprep.mubr.f32.mxu0 0.0
    %1031 = vmatmul.mubr.f32.gmra.mrb[0].mxu0 %v962
    %v1032 = vpop.f32.mrb[0].mxu0
    %v1033 = vadd.f32 0.0, %v1032
    %v1034 = vpop.f32.mrb[0].mxu0
    %1035 = vmatprep.mubr.f32.mxu0 0.0
    %1036 = vmatmul.mubr.f32.gmra.mrb[0].mxu0 %v964
    %v1037 = vpop.f32.mrb[0].mxu0
    %v1038 = vadd.f32 0.0, %v1037
    %v1039 = vpop.f32.mrb[0].mxu0
    %1040 = vdwg.mxu0
    %v1041 = vadd.f32 %v943, %v1033
    %v1042 = vadd.f32 %v948, %v1038
    %v1043 = vld [vmem:[%s5 + $0x4] sm:$0x1]
    %v1044 = vlaneseq
    %v1045 = vshrl.u32 %v1044, 7
    %v1046 = vsub.s32 0, %v1045
    %v1047 = vrot.slane %v1043, %v1046
    %v1048 = vadd.f32 %v1041, %v1047
    %v1049 = vadd.f32 %v1042, %v1047
    %v1050 = vsub.f32 0.0, %v1048
    %v1051 = vsub.f32 0.0, %v1049
    %v1052 = vmul.f32 %v1050, 1.442695
    %v1053 = vpow.pop %v1052
    %v1054 = vmul.f32 %v1051, 1.442695
    %v1055 = vpow.pop %v1054
    %v1056 = vadd.f32 %v1053, 1.0
    %v1057 = vadd.f32 %v1055, 1.0
    %v1058 = vrcp.pop %v1056
    %v1059 = vrcp.pop %v1057
    %1062 = vrot.lane.b32.xlu0 %v1058, 96
    %v1063 = vpop.permute.xlu0 %1062
    %1064 = vrot.lane.b32.xlu0 %v1059, 96
    %v1065 = vpop.permute.xlu0 %1064
    %v1068 = vmul.f32 %v1048, %v1063
    %v1069 = vmul.f32 %v1049, %v1065
    %v1071 = vsel %vm788, %v1068, 0
    %1073 = vmatprep.subr.mxu0 0.0
    %1074 = vmatpush1.msra.mxu0 %v279
    %1075 = vmatprep.subr.mxu0 0.0
    %1076 = vmatpush1.msra.mxu0 %v284
    %1077 = vmatprep.subr.mxu0 0.0
    %1078 = vmatpush1.msra.mxu0 %v289
    %1079 = vmatprep.subr.mxu0 0.0
    %1080 = vmatpush1.msra.mxu0 %v294
    %1081 = vmatprep.subr.mxu0 0.0
    %1082 = vmatpush1.msra.mxu0 0.0
    %1083 = vmatprep.subr.mxu0 0.0
    %1084 = vmatpush1.msra.mxu0 0.0
    %1085 = vmatprep.subr.mxu0 0.0
    %1086 = vmatpush1.msra.mxu0 0.0
    %1087 = vmatprep.subr.mxu0 0.0
    %1088 = vmatpush1.msra.mxu0 0.0
    %1089 = vmatprep.subr.mxu0 0.0
    %1090 = vmatpush1.msra.mxu0 0.0
    %1091 = vmatprep.subr.mxu0 0.0
    %1092 = vmatpush1.msra.mxu0 0.0
    %1093 = vmatprep.subr.mxu0 0.0
    %1094 = vmatpush1.msra.mxu0 0.0
    %1095 = vmatprep.subr.mxu0 0.0
    %1096 = vmatpush1.msra.mxu0 0.0
    %1097 = vmatprep.subr.mxu0 0.0
    %1098 = vmatpush1.msra.mxu0 0.0
    %1099 = vmatprep.subr.mxu0 0.0
    %1100 = vmatpush1.msra.mxu0 0.0
    %1101 = vmatprep.subr.mxu0 0.0
    %1102 = vmatpush1.msra.mxu0 0.0
    %1103 = vmatprep.subr.mxu0 0.0
    %1104 = vmatpush1.msra.mxu0 0.0
    %1105 = vmatprep.subr.mxu0 0.0
    %1106 = vmatpush1.msra.mxu0 0.0
    %1107 = vmatprep.subr.mxu0 0.0
    %1108 = vmatpush1.msra.mxu0 0.0
    %1109 = vmatprep.subr.mxu0 0.0
    %1110 = vmatpush1.msra.mxu0 0.0
    %1111 = vmatprep.subr.mxu0 0.0
    %1112 = vmatpush1.msra.mxu0 0.0
    %1113 = vmatprep.subr.mxu0 0.0
    %1114 = vmatpush1.msra.mxu0 0.0
    %1115 = vmatprep.subr.mxu0 0.0
    %1116 = vmatpush1.msra.mxu0 0.0
    %1117 = vmatprep.subr.mxu0 0.0
    %1118 = vmatpush1.msra.mxu0 0.0
    %1119 = vmatprep.subr.mxu0 0.0
    %1120 = vmatpush1.msra.mxu0 0.0
    %1121 = vmatprep.subr.mxu0 0.0
    %1122 = vmatpush1.msra.mxu0 0.0
    %1123 = vmatprep.subr.mxu0 0.0
    %1124 = vmatpush1.msra.mxu0 0.0
    %1125 = vmatprep.subr.mxu0 0.0
    %1126 = vmatpush1.msra.mxu0 0.0
    %1127 = vmatprep.subr.mxu0 0.0
    %1128 = vmatpush1.msra.mxu0 0.0
    %1129 = vmatprep.subr.mxu0 0.0
    %1130 = vmatpush1.msra.mxu0 0.0
    %1131 = vmatprep.subr.mxu0 0.0
    %1132 = vmatpush1.msra.mxu0 0.0
    %1133 = vmatprep.subr.mxu0 0.0
    %1134 = vmatpush1.msra.mxu0 0.0
    %1135 = vmatprep.subr.mxu0 0.0
    %1136 = vmatpush1.msra.mxu0 0.0
    %1137 = vmatprep.mubr.f32.mxu0 0.0
    %1138 = vmatmul.mubr.f32.gmra.mrb[0].mxu0 %v1071
    %v1139 = vpop.f32.mrb[0].mxu0
    %v1140 = vadd.f32 %v372, %v1139
    %v1141 = vpop.f32.mrb[0].mxu0
    %1142 = vdwg.mxu0
    %v1143 = vmul.f32 %v1140, 0.70710677
    %vm1144 = vcmask 64512
    %v1145 = vsel %vm1144, %v1143, -inf
    %1146 = vmax.xlane.f32.xlu0 %v1145
    %v1147 = vpop.xlane.xlu0 %1146
    %v1148 = vsub.f32 %v1143, %v1147
    %v1149 = vmul.f32 %v1148, 1.442695
    %v1150 = vpow.pop %v1149
    %v1151 = vsel %vm1144, %v1150, 0.0
    %1152 = vadd.xlane.f32.xlu0 %v1151
    %v1153 = vpop.xlane.xlu0 %1152
    %v1154 = vrcp.pop %v1153
    %v1155 = vmul.f32 %v1150, %v1154
    %v1156 = vlaneseq
    %v1157 = vshrl.u32 %v1156, 7
    %v1158 = vsub.s32 0, %v1157
    %v1159 = vrot.slane %v107, %v1158
    %v1161 = vsel %vm1144, %v1155, 0
    %1163 = vmatprep.subr.mxu0 0.0
    %1164 = vmatpush1.msra.mxu0 %v478
    %1165 = vmatprep.subr.mxu0 0.0
    %1166 = vmatpush1.msra.mxu0 0.0
    %1167 = vmatprep.subr.mxu0 0.0
    %1168 = vmatpush1.msra.mxu0 0.0
    %1169 = vmatprep.subr.mxu0 0.0
    %1170 = vmatpush1.msra.mxu0 0.0
    %1171 = vmatprep.subr.mxu0 0.0
    %1172 = vmatpush1.msra.mxu0 0.0
    %1173 = vmatprep.subr.mxu0 0.0
    %1174 = vmatpush1.msra.mxu0 0.0
    %1175 = vmatprep.subr.mxu0 0.0
    %1176 = vmatpush1.msra.mxu0 0.0
    %1177 = vmatprep.subr.mxu0 0.0
    %1178 = vmatpush1.msra.mxu0 0.0
    %1179 = vmatprep.subr.mxu0 0.0
    %1180 = vmatpush1.msra.mxu0 0.0
    %1181 = vmatprep.subr.mxu0 0.0
    %1182 = vmatpush1.msra.mxu0 0.0
    %1183 = vmatprep.subr.mxu0 0.0
    %1184 = vmatpush1.msra.mxu0 0.0
    %1185 = vmatprep.subr.mxu0 0.0
    %1186 = vmatpush1.msra.mxu0 0.0
    %1187 = vmatprep.subr.mxu0 0.0
    %1188 = vmatpush1.msra.mxu0 0.0
    %1189 = vmatprep.subr.mxu0 0.0
    %1190 = vmatpush1.msra.mxu0 0.0
    %1191 = vmatprep.subr.mxu0 0.0
    %1192 = vmatpush1.msra.mxu0 0.0
    %1193 = vmatprep.subr.mxu0 0.0
    %1194 = vmatpush1.msra.mxu0 0.0
    %1195 = vmatprep.subr.mxu0 0.0
    %1196 = vmatpush1.msra.mxu0 0.0
    %1197 = vmatprep.subr.mxu0 0.0
    %1198 = vmatpush1.msra.mxu0 0.0
    %1199 = vmatprep.subr.mxu0 0.0
    %1200 = vmatpush1.msra.mxu0 0.0
    %1201 = vmatprep.subr.mxu0 0.0
    %1202 = vmatpush1.msra.mxu0 0.0
    %1203 = vmatprep.subr.mxu0 0.0
    %1204 = vmatpush1.msra.mxu0 0.0
    %1205 = vmatprep.subr.mxu0 0.0
    %1206 = vmatpush1.msra.mxu0 0.0
    %1207 = vmatprep.subr.mxu0 0.0
    %1208 = vmatpush1.msra.mxu0 0.0
    %1209 = vmatprep.subr.mxu0 0.0
    %1210 = vmatpush1.msra.mxu0 0.0
    %1211 = vmatprep.subr.mxu0 0.0
    %1212 = vmatpush1.msra.mxu0 0.0
    %1213 = vmatprep.subr.mxu0 0.0
    %1214 = vmatpush1.msra.mxu0 0.0
    %1215 = vmatprep.subr.mxu0 0.0
    %1216 = vmatpush1.msra.mxu0 0.0
    %1217 = vmatprep.subr.mxu0 0.0
    %1218 = vmatpush1.msra.mxu0 0.0
    %1219 = vmatprep.subr.mxu0 0.0
    %1220 = vmatpush1.msra.mxu0 0.0
    %1221 = vmatprep.subr.mxu0 0.0
    %1222 = vmatpush1.msra.mxu0 0.0
    %1223 = vmatprep.subr.mxu0 0.0
    %1224 = vmatpush1.msra.mxu0 0.0
    %1225 = vmatprep.subr.mxu0 0.0
    %1226 = vmatpush1.msra.mxu0 0.0
    %1227 = vmatprep.mubr.f32.mxu0 0.0
    %1228 = vmatmul.mubr.f32.gmra.mrb[0].mxu0 %v1161
    %v1229 = vpop.f32.mrb[0].mxu0
    %v1230 = vadd.f32 %v1159, %v1229
    %v1231 = vpop.f32.mrb[0].mxu0
    %1232 = vdwg.mxu0
    %v1234 = vsel %vm788, %v1069, 0
    %1236 = vmatprep.subr.mxu0 0.0
    %1237 = vmatpush1.msra.mxu0 %v552
    %1238 = vmatprep.subr.mxu0 0.0
    %1239 = vmatpush1.msra.mxu0 %v557
    %1240 = vmatprep.subr.mxu0 0.0
    %1241 = vmatpush1.msra.mxu0 %v562
    %1242 = vmatprep.subr.mxu0 0.0
    %1243 = vmatpush1.msra.mxu0 %v567
    %1244 = vmatprep.subr.mxu0 0.0
    %1245 = vmatpush1.msra.mxu0 0.0
    %1246 = vmatprep.subr.mxu0 0.0
    %1247 = vmatpush1.msra.mxu0 0.0
    %1248 = vmatprep.subr.mxu0 0.0
    %1249 = vmatpush1.msra.mxu0 0.0
    %1250 = vmatprep.subr.mxu0 0.0
    %1251 = vmatpush1.msra.mxu0 0.0
    %1252 = vmatprep.subr.mxu0 0.0
    %1253 = vmatpush1.msra.mxu0 0.0
    %1254 = vmatprep.subr.mxu0 0.0
    %1255 = vmatpush1.msra.mxu0 0.0
    %1256 = vmatprep.subr.mxu0 0.0
    %1257 = vmatpush1.msra.mxu0 0.0
    %1258 = vmatprep.subr.mxu0 0.0
    %1259 = vmatpush1.msra.mxu0 0.0
    %1260 = vmatprep.subr.mxu0 0.0
    %1261 = vmatpush1.msra.mxu0 0.0
    %1262 = vmatprep.subr.mxu0 0.0
    %1263 = vmatpush1.msra.mxu0 0.0
    %1264 = vmatprep.subr.mxu0 0.0
    %1265 = vmatpush1.msra.mxu0 0.0
    %1266 = vmatprep.subr.mxu0 0.0
    %1267 = vmatpush1.msra.mxu0 0.0
    %1268 = vmatprep.subr.mxu0 0.0
    %1269 = vmatpush1.msra.mxu0 0.0
    %1270 = vmatprep.subr.mxu0 0.0
    %1271 = vmatpush1.msra.mxu0 0.0
    %1272 = vmatprep.subr.mxu0 0.0
    %1273 = vmatpush1.msra.mxu0 0.0
    %1274 = vmatprep.subr.mxu0 0.0
    %1275 = vmatpush1.msra.mxu0 0.0
    %1276 = vmatprep.subr.mxu0 0.0
    %1277 = vmatpush1.msra.mxu0 0.0
    %1278 = vmatprep.subr.mxu0 0.0
    %1279 = vmatpush1.msra.mxu0 0.0
    %1280 = vmatprep.subr.mxu0 0.0
    %1281 = vmatpush1.msra.mxu0 0.0
    %1282 = vmatprep.subr.mxu0 0.0
    %1283 = vmatpush1.msra.mxu0 0.0
    %1284 = vmatprep.subr.mxu0 0.0
    %1285 = vmatpush1.msra.mxu0 0.0
    %1286 = vmatprep.subr.mxu0 0.0
    %1287 = vmatpush1.msra.mxu0 0.0
    %1288 = vmatprep.subr.mxu0 0.0
    %1289 = vmatpush1.msra.mxu0 0.0
    %1290 = vmatprep.subr.mxu0 0.0
    %1291 = vmatpush1.msra.mxu0 0.0
    %1292 = vmatprep.subr.mxu0 0.0
    %1293 = vmatpush1.msra.mxu0 0.0
    %1294 = vmatprep.subr.mxu0 0.0
    %1295 = vmatpush1.msra.mxu0 0.0
    %1296 = vmatprep.subr.mxu0 0.0
    %1297 = vmatpush1.msra.mxu0 0.0
    %1298 = vmatprep.subr.mxu0 0.0
    %1299 = vmatpush1.msra.mxu0 0.0
    %1300 = vmatprep.mubr.f32.mxu0 0.0
    %1301 = vmatmul.mubr.f32.gmra.mrb[0].mxu0 %v1234
    %v1302 = vpop.f32.mrb[0].mxu0
    %v1303 = vadd.f32 %v641, %v1302
    %v1304 = vpop.f32.mrb[0].mxu0
    %1305 = vdwg.mxu0
    %v1306 = vmul.f32 %v1303, 0.70710677
    %v1307 = vsel %vm1144, %v1306, -inf
    %1308 = vmax.xlane.f32.xlu0 %v1307
    %v1309 = vpop.xlane.xlu0 %1308
    %v1310 = vsub.f32 %v1306, %v1309
    %v1311 = vmul.f32 %v1310, 1.442695
    %v1312 = vpow.pop %v1311
    %v1313 = vsel %vm1144, %v1312, 0.0
    %1314 = vadd.xlane.f32.xlu0 %v1313
    %v1315 = vpop.xlane.xlu0 %1314
    %v1316 = vrcp.pop %v1315
    %v1317 = vmul.f32 %v1312, %v1316
    %v1319 = vsel %vm1144, %v1317, 0
    %1321 = vmatprep.subr.mxu0 0.0
    %1322 = vmatpush1.msra.mxu0 %v715
    %1323 = vmatprep.subr.mxu0 0.0
    %1324 = vmatpush1.msra.mxu0 0.0
    %1325 = vmatprep.subr.mxu0 0.0
    %1326 = vmatpush1.msra.mxu0 0.0
    %1327 = vmatprep.subr.mxu0 0.0
    %1328 = vmatpush1.msra.mxu0 0.0
    %1329 = vmatprep.subr.mxu0 0.0
    %1330 = vmatpush1.msra.mxu0 0.0
    %1331 = vmatprep.subr.mxu0 0.0
    %1332 = vmatpush1.msra.mxu0 0.0
    %1333 = vmatprep.subr.mxu0 0.0
    %1334 = vmatpush1.msra.mxu0 0.0
    %1335 = vmatprep.subr.mxu0 0.0
    %1336 = vmatpush1.msra.mxu0 0.0
    %1337 = vmatprep.subr.mxu0 0.0
    %1338 = vmatpush1.msra.mxu0 0.0
    %1339 = vmatprep.subr.mxu0 0.0
    %1340 = vmatpush1.msra.mxu0 0.0
    %1341 = vmatprep.subr.mxu0 0.0
    %1342 = vmatpush1.msra.mxu0 0.0
    %1343 = vmatprep.subr.mxu0 0.0
    %1344 = vmatpush1.msra.mxu0 0.0
    %1345 = vmatprep.subr.mxu0 0.0
    %1346 = vmatpush1.msra.mxu0 0.0
    %1347 = vmatprep.subr.mxu0 0.0
    %1348 = vmatpush1.msra.mxu0 0.0
    %1349 = vmatprep.subr.mxu0 0.0
    %1350 = vmatpush1.msra.mxu0 0.0
    %1351 = vmatprep.subr.mxu0 0.0
    %1352 = vmatpush1.msra.mxu0 0.0
    %1353 = vmatprep.subr.mxu0 0.0
    %1354 = vmatpush1.msra.mxu0 0.0
    %1355 = vmatprep.subr.mxu0 0.0
    %1356 = vmatpush1.msra.mxu0 0.0
    %1357 = vmatprep.subr.mxu0 0.0
    %1358 = vmatpush1.msra.mxu0 0.0
    %1359 = vmatprep.subr.mxu0 0.0
    %1360 = vmatpush1.msra.mxu0 0.0
    %1361 = vmatprep.subr.mxu0 0.0
    %1362 = vmatpush1.msra.mxu0 0.0
    %1363 = vmatprep.subr.mxu0 0.0
    %1364 = vmatpush1.msra.mxu0 0.0
    %1365 = vmatprep.subr.mxu0 0.0
    %1366 = vmatpush1.msra.mxu0 0.0
    %1367 = vmatprep.subr.mxu0 0.0
    %1368 = vmatpush1.msra.mxu0 0.0
    %1369 = vmatprep.subr.mxu0 0.0
    %1370 = vmatpush1.msra.mxu0 0.0
    %1371 = vmatprep.subr.mxu0 0.0
    %1372 = vmatpush1.msra.mxu0 0.0
    %1373 = vmatprep.subr.mxu0 0.0
    %1374 = vmatpush1.msra.mxu0 0.0
    %1375 = vmatprep.subr.mxu0 0.0
    %1376 = vmatpush1.msra.mxu0 0.0
    %1377 = vmatprep.subr.mxu0 0.0
    %1378 = vmatpush1.msra.mxu0 0.0
    %1379 = vmatprep.subr.mxu0 0.0
    %1380 = vmatpush1.msra.mxu0 0.0
    %1381 = vmatprep.subr.mxu0 0.0
    %1382 = vmatpush1.msra.mxu0 0.0
    %1383 = vmatprep.subr.mxu0 0.0
    %1384 = vmatpush1.msra.mxu0 0.0
    %1385 = vmatprep.mubr.f32.mxu0 0.0
    %1386 = vmatmul.mubr.f32.gmra.mrb[0].mxu0 %v1319
    %v1387 = vpop.f32.mrb[0].mxu0
    %v1388 = vadd.f32 %v1159, %v1387
    %v1389 = vpop.f32.mrb[0].mxu0
    %1390 = vdwg.mxu0
    %v1391 = vadd.f32 %v1068, %v1230
    %v1392 = vadd.f32 %v1069, %v1388
    %v1393 = vmul.f32 %v1391, 0.70710677
    %v1394 = vmul.f32 %v1392, 0.70710677
    %v1395 = vadd.f32 %v1393, %v188
    %v1396 = vadd.f32 %v1394, %v193
    %v1397 = vmul.f32 %v1395, 0.70710677
    %v1398 = vmul.f32 %v1396, 0.70710677
    %v1401 = vrot.slane %v1397, 6
    %v1402 = vrot.slane %v1398, 6
    %v1403 = vsel %vm747, %v1401, %v1402
    %v1406 = vsel %vm747, 1.0, %v1401
    %v1407 = vsel %vm758, 1.0, %v1406
    %v1408 = vsel %vm759, 1.0, %v1403
    %s1409 = scalar_lea.vmem [#allocation7], 96
    %v1410 = vld [vmem:[%s1409] sm:$0xff]
    %v1411 = vld [vmem:[%s1409 + $0x8] sm:$0xff]
    %v1412 = vld [vmem:[%s1409 + $0x10] sm:$0xff]
    %v1413 = vld [vmem:[%s1409 + $0x18] sm:$0xff]
    %v1415 = vrot.slane %v1406, 1
    %v1416 = vrot.slane %v1403, 1
    %v1417 = vsel %vm773, %v1415, %v1416
    %v1418 = vrot.slane %v1402, 1
    %v1419 = vsel %vm773, %v1416, %v1418
    %v1422 = vsel %vm770, 1.0, %v1417
    %v1423 = vsel %vm771, 1.0, %v1419
    %s1424 = scalar_lea.vmem [#allocation7], 128
    %v1425 = vld [vmem:[%s1424] sm:$0xff]
    %v1426 = vld [vmem:[%s1424 + $0x8] sm:$0xff]
    %v1427 = vld [vmem:[%s1424 + $0x10] sm:$0xff]
    %v1428 = vld [vmem:[%s1424 + $0x18] sm:$0xff]
    %v1430 = vsel %vm788, %v1422, 0
    %v1433 = vsel %vm788, %v1423, 0
    %1435 = vmatprep.subr.mxu0 0.0
    %1436 = vmatpush1.msra.mxu0 %v1425
    %1437 = vmatprep.subr.mxu0 0.0
    %1438 = vmatpush1.msra.mxu0 %v1426
    %1439 = vmatprep.subr.mxu0 0.0
    %1440 = vmatpush1.msra.mxu0 %v1427
    %1441 = vmatprep.subr.mxu0 0.0
    %1442 = vmatpush1.msra.mxu0 %v1428
    %1443 = vmatprep.subr.mxu0 0.0
    %1444 = vmatpush1.msra.mxu0 0.0
    %1445 = vmatprep.subr.mxu0 0.0
    %1446 = vmatpush1.msra.mxu0 0.0
    %1447 = vmatprep.subr.mxu0 0.0
    %1448 = vmatpush1.msra.mxu0 0.0
    %1449 = vmatprep.subr.mxu0 0.0
    %1450 = vmatpush1.msra.mxu0 0.0
    %1451 = vmatprep.subr.mxu0 0.0
    %1452 = vmatpush1.msra.mxu0 0.0
    %1453 = vmatprep.subr.mxu0 0.0
    %1454 = vmatpush1.msra.mxu0 0.0
    %1455 = vmatprep.subr.mxu0 0.0
    %1456 = vmatpush1.msra.mxu0 0.0
    %1457 = vmatprep.subr.mxu0 0.0
    %1458 = vmatpush1.msra.mxu0 0.0
    %1459 = vmatprep.subr.mxu0 0.0
    %1460 = vmatpush1.msra.mxu0 0.0
    %1461 = vmatprep.subr.mxu0 0.0
    %1462 = vmatpush1.msra.mxu0 0.0
    %1463 = vmatprep.subr.mxu0 0.0
    %1464 = vmatpush1.msra.mxu0 0.0
    %1465 = vmatprep.subr.mxu0 0.0
    %1466 = vmatpush1.msra.mxu0 0.0
    %1467 = vmatprep.subr.mxu0 0.0
    %1468 = vmatpush1.msra.mxu0 0.0
    %1469 = vmatprep.subr.mxu0 0.0
    %1470 = vmatpush1.msra.mxu0 0.0
    %1471 = vmatprep.subr.mxu0 0.0
    %1472 = vmatpush1.msra.mxu0 0.0
    %1473 = vmatprep.subr.mxu0 0.0
    %1474 = vmatpush1.msra.mxu0 0.0
    %1475 = vmatprep.subr.mxu0 0.0
    %1476 = vmatpush1.msra.mxu0 0.0
    %1477 = vmatprep.subr.mxu0 0.0
    %1478 = vmatpush1.msra.mxu0 0.0
    %1479 = vmatprep.subr.mxu0 0.0
    %1480 = vmatpush1.msra.mxu0 0.0
    %1481 = vmatprep.subr.mxu0 0.0
    %1482 = vmatpush1.msra.mxu0 0.0
    %1483 = vmatprep.subr.mxu0 0.0
    %1484 = vmatpush1.msra.mxu0 0.0
    %1485 = vmatprep.subr.mxu0 0.0
    %1486 = vmatpush1.msra.mxu0 0.0
    %1487 = vmatprep.subr.mxu0 0.0
    %1488 = vmatpush1.msra.mxu0 0.0
    %1489 = vmatprep.subr.mxu0 0.0
    %1490 = vmatpush1.msra.mxu0 0.0
    %1491 = vmatprep.subr.mxu0 0.0
    %1492 = vmatpush1.msra.mxu0 0.0
    %1493 = vmatprep.subr.mxu0 0.0
    %1494 = vmatpush1.msra.mxu0 0.0
    %1495 = vmatprep.subr.mxu0 0.0
    %1496 = vmatpush1.msra.mxu0 0.0
    %1497 = vmatprep.subr.mxu0 0.0
    %1498 = vmatpush1.msra.mxu0 0.0
    %1499 = vmatprep.mubr.f32.mxu0 0.0
    %1500 = vmatmul.mubr.f32.gmra.mrb[0].mxu0 %v1430
    %v1501 = vpop.f32.mrb[0].mxu0
    %v1502 = vadd.f32 0.0, %v1501
    %v1503 = vpop.f32.mrb[0].mxu0
    %1504 = vmatprep.mubr.f32.mxu0 0.0
    %1505 = vmatmul.mubr.f32.gmra.mrb[0].mxu0 %v1433
    %v1506 = vpop.f32.mrb[0].mxu0
    %v1507 = vadd.f32 0.0, %v1506
    %v1508 = vpop.f32.mrb[0].mxu0
    %1509 = vdwg.mxu0
    %v1511 = vsel %vm788, %v1407, 0
    %v1514 = vsel %vm788, %v1408, 0
    %1516 = vmatprep.subr.mxu0 0.0
    %1517 = vmatpush1.msra.mxu0 %v1410
    %1518 = vmatprep.subr.mxu0 0.0
    %1519 = vmatpush1.msra.mxu0 %v1411
    %1520 = vmatprep.subr.mxu0 0.0
    %1521 = vmatpush1.msra.mxu0 %v1412
    %1522 = vmatprep.subr.mxu0 0.0
    %1523 = vmatpush1.msra.mxu0 %v1413
    %1524 = vmatprep.subr.mxu0 0.0
    %1525 = vmatpush1.msra.mxu0 0.0
    %1526 = vmatprep.subr.mxu0 0.0
    %1527 = vmatpush1.msra.mxu0 0.0
    %1528 = vmatprep.subr.mxu0 0.0
    %1529 = vmatpush1.msra.mxu0 0.0
    %1530 = vmatprep.subr.mxu0 0.0
    %1531 = vmatpush1.msra.mxu0 0.0
    %1532 = vmatprep.subr.mxu0 0.0
    %1533 = vmatpush1.msra.mxu0 0.0
    %1534 = vmatprep.subr.mxu0 0.0
    %1535 = vmatpush1.msra.mxu0 0.0
    %1536 = vmatprep.subr.mxu0 0.0
    %1537 = vmatpush1.msra.mxu0 0.0
    %1538 = vmatprep.subr.mxu0 0.0
    %1539 = vmatpush1.msra.mxu0 0.0
    %1540 = vmatprep.subr.mxu0 0.0
    %1541 = vmatpush1.msra.mxu0 0.0
    %1542 = vmatprep.subr.mxu0 0.0
    %1543 = vmatpush1.msra.mxu0 0.0
    %1544 = vmatprep.subr.mxu0 0.0
    %1545 = vmatpush1.msra.mxu0 0.0
    %1546 = vmatprep.subr.mxu0 0.0
    %1547 = vmatpush1.msra.mxu0 0.0
    %1548 = vmatprep.subr.mxu0 0.0
    %1549 = vmatpush1.msra.mxu0 0.0
    %1550 = vmatprep.subr.mxu0 0.0
    %1551 = vmatpush1.msra.mxu0 0.0
    %1552 = vmatprep.subr.mxu0 0.0
    %1553 = vmatpush1.msra.mxu0 0.0
    %1554 = vmatprep.subr.mxu0 0.0
    %1555 = vmatpush1.msra.mxu0 0.0
    %1556 = vmatprep.subr.mxu0 0.0
    %1557 = vmatpush1.msra.mxu0 0.0
    %1558 = vmatprep.subr.mxu0 0.0
    %1559 = vmatpush1.msra.mxu0 0.0
    %1560 = vmatprep.subr.mxu0 0.0
    %1561 = vmatpush1.msra.mxu0 0.0
    %1562 = vmatprep.subr.mxu0 0.0
    %1563 = vmatpush1.msra.mxu0 0.0
    %1564 = vmatprep.subr.mxu0 0.0
    %1565 = vmatpush1.msra.mxu0 0.0
    %1566 = vmatprep.subr.mxu0 0.0
    %1567 = vmatpush1.msra.mxu0 0.0
    %1568 = vmatprep.subr.mxu0 0.0
    %1569 = vmatpush1.msra.mxu0 0.0
    %1570 = vmatprep.subr.mxu0 0.0
    %1571 = vmatpush1.msra.mxu0 0.0
    %1572 = vmatprep.subr.mxu0 0.0
    %1573 = vmatpush1.msra.mxu0 0.0
    %1574 = vmatprep.subr.mxu0 0.0
    %1575 = vmatpush1.msra.mxu0 0.0
    %1576 = vmatprep.subr.mxu0 0.0
    %1577 = vmatpush1.msra.mxu0 0.0
    %1578 = vmatprep.subr.mxu0 0.0
    %1579 = vmatpush1.msra.mxu0 0.0
    %1580 = vmatprep.mubr.f32.mxu0 0.0
    %1581 = vmatmul.mubr.f32.gmra.mrb[0].mxu0 %v1511
    %v1582 = vpop.f32.mrb[0].mxu0
    %v1583 = vadd.f32 %v1502, %v1582
    %v1584 = vpop.f32.mrb[0].mxu0
    %1585 = vmatprep.mubr.f32.mxu0 0.0
    %1586 = vmatmul.mubr.f32.gmra.mrb[0].mxu0 %v1514
    %v1587 = vpop.f32.mrb[0].mxu0
    %v1588 = vadd.f32 %v1507, %v1587
    %v1589 = vpop.f32.mrb[0].mxu0
    %1590 = vdwg.mxu0
    %s1591 = scalar_lea.vmem [#allocation7], 160
    %v1592 = vld [vmem:[%s1591] sm:$0xff]
    %v1593 = vld [vmem:[%s1591 + $0x8] sm:$0xff]
    %v1594 = vld [vmem:[%s1591 + $0x10] sm:$0xff]
    %v1595 = vld [vmem:[%s1591 + $0x18] sm:$0xff]
    %v1596 = vrot.slane %v1406, 2
    %v1597 = vrot.slane %v1403, 2
    %v1598 = vsel %vm956, %v1596, %v1597
    %v1599 = vrot.slane %v1402, 2
    %v1600 = vsel %vm956, %v1597, %v1599
    %v1601 = vsel %vm788, %v1598, 0
    %v1603 = vsel %vm788, %v1600, 0
    %1605 = vmatprep.subr.mxu0 0.0
    %1606 = vmatpush1.msra.mxu0 %v1592
    %1607 = vmatprep.subr.mxu0 0.0
    %1608 = vmatpush1.msra.mxu0 %v1593
    %1609 = vmatprep.subr.mxu0 0.0
    %1610 = vmatpush1.msra.mxu0 %v1594
    %1611 = vmatprep.subr.mxu0 0.0
    %1612 = vmatpush1.msra.mxu0 %v1595
    %1613 = vmatprep.subr.mxu0 0.0
    %1614 = vmatpush1.msra.mxu0 0.0
    %1615 = vmatprep.subr.mxu0 0.0
    %1616 = vmatpush1.msra.mxu0 0.0
    %1617 = vmatprep.subr.mxu0 0.0
    %1618 = vmatpush1.msra.mxu0 0.0
    %1619 = vmatprep.subr.mxu0 0.0
    %1620 = vmatpush1.msra.mxu0 0.0
    %1621 = vmatprep.subr.mxu0 0.0
    %1622 = vmatpush1.msra.mxu0 0.0
    %1623 = vmatprep.subr.mxu0 0.0
    %1624 = vmatpush1.msra.mxu0 0.0
    %1625 = vmatprep.subr.mxu0 0.0
    %1626 = vmatpush1.msra.mxu0 0.0
    %1627 = vmatprep.subr.mxu0 0.0
    %1628 = vmatpush1.msra.mxu0 0.0
    %1629 = vmatprep.subr.mxu0 0.0
    %1630 = vmatpush1.msra.mxu0 0.0
    %1631 = vmatprep.subr.mxu0 0.0
    %1632 = vmatpush1.msra.mxu0 0.0
    %1633 = vmatprep.subr.mxu0 0.0
    %1634 = vmatpush1.msra.mxu0 0.0
    %1635 = vmatprep.subr.mxu0 0.0
    %1636 = vmatpush1.msra.mxu0 0.0
    %1637 = vmatprep.subr.mxu0 0.0
    %1638 = vmatpush1.msra.mxu0 0.0
    %1639 = vmatprep.subr.mxu0 0.0
    %1640 = vmatpush1.msra.mxu0 0.0
    %1641 = vmatprep.subr.mxu0 0.0
    %1642 = vmatpush1.msra.mxu0 0.0
    %1643 = vmatprep.subr.mxu0 0.0
    %1644 = vmatpush1.msra.mxu0 0.0
    %1645 = vmatprep.subr.mxu0 0.0
    %1646 = vmatpush1.msra.mxu0 0.0
    %1647 = vmatprep.subr.mxu0 0.0
    %1648 = vmatpush1.msra.mxu0 0.0
    %1649 = vmatprep.subr.mxu0 0.0
    %1650 = vmatpush1.msra.mxu0 0.0
    %1651 = vmatprep.subr.mxu0 0.0
    %1652 = vmatpush1.msra.mxu0 0.0
    %1653 = vmatprep.subr.mxu0 0.0
    %1654 = vmatpush1.msra.mxu0 0.0
    %1655 = vmatprep.subr.mxu0 0.0
    %1656 = vmatpush1.msra.mxu0 0.0
    %1657 = vmatprep.subr.mxu0 0.0
    %1658 = vmatpush1.msra.mxu0 0.0
    %1659 = vmatprep.subr.mxu0 0.0
    %1660 = vmatpush1.msra.mxu0 0.0
    %1661 = vmatprep.subr.mxu0 0.0
    %1662 = vmatpush1.msra.mxu0 0.0
    %1663 = vmatprep.subr.mxu0 0.0
    %1664 = vmatpush1.msra.mxu0 0.0
    %1665 = vmatprep.subr.mxu0 0.0
    %1666 = vmatpush1.msra.mxu0 0.0
    %1667 = vmatprep.subr.mxu0 0.0
    %1668 = vmatpush1.msra.mxu0 0.0
    %1669 = vmatprep.mubr.f32.mxu0 0.0
    %1670 = vmatmul.mubr.f32.gmra.mrb[0].mxu0 %v1601
    %v1671 = vpop.f32.mrb[0].mxu0
    %v1672 = vadd.f32 0.0, %v1671
    %v1673 = vpop.f32.mrb[0].mxu0
    %1674 = vmatprep.mubr.f32.mxu0 0.0
    %1675 = vmatmul.mubr.f32.gmra.mrb[0].mxu0 %v1603
    %v1676 = vpop.f32.mrb[0].mxu0
    %v1677 = vadd.f32 0.0, %v1676
    %v1678 = vpop.f32.mrb[0].mxu0
    %1679 = vdwg.mxu0
    %v1680 = vadd.f32 %v1583, %v1672
    %v1681 = vadd.f32 %v1588, %v1677
    %v1682 = vld [vmem:[%s5 + $0x5] sm:$0x1]
    %v1683 = vlaneseq
    %v1684 = vshrl.u32 %v1683, 7
    %v1685 = vsub.s32 0, %v1684
    %v1686 = vrot.slane %v1682, %v1685
    %v1687 = vadd.f32 %v1680, %v1686
    %v1688 = vadd.f32 %v1681, %v1686
    %v1689 = vsub.f32 0.0, %v1687
    %v1690 = vsub.f32 0.0, %v1688
    %v1691 = vmul.f32 %v1689, 1.442695
    %v1692 = vpow.pop %v1691
    %v1693 = vmul.f32 %v1690, 1.442695
    %v1694 = vpow.pop %v1693
    %v1695 = vadd.f32 %v1692, 1.0
    %v1696 = vadd.f32 %v1694, 1.0
    %v1697 = vrcp.pop %v1695
    %v1698 = vrcp.pop %v1696
    %1701 = vrot.lane.b32.xlu0 %v1697, 96
    %v1702 = vpop.permute.xlu0 %1701
    %1703 = vrot.lane.b32.xlu0 %v1698, 96
    %v1704 = vpop.permute.xlu0 %1703
    %v1707 = vmul.f32 %v1687, %v1702
    %v1708 = vmul.f32 %v1688, %v1704
    %v1710 = vsel %vm788, %v1707, 0
    %1712 = vmatprep.subr.mxu0 0.0
    %1713 = vmatpush1.msra.mxu0 %v279
    %1714 = vmatprep.subr.mxu0 0.0
    %1715 = vmatpush1.msra.mxu0 %v284
    %1716 = vmatprep.subr.mxu0 0.0
    %1717 = vmatpush1.msra.mxu0 %v289
    %1718 = vmatprep.subr.mxu0 0.0
    %1719 = vmatpush1.msra.mxu0 %v294
    %1720 = vmatprep.subr.mxu0 0.0
    %1721 = vmatpush1.msra.mxu0 0.0
    %1722 = vmatprep.subr.mxu0 0.0
    %1723 = vmatpush1.msra.mxu0 0.0
    %1724 = vmatprep.subr.mxu0 0.0
    %1725 = vmatpush1.msra.mxu0 0.0
    %1726 = vmatprep.subr.mxu0 0.0
    %1727 = vmatpush1.msra.mxu0 0.0
    %1728 = vmatprep.subr.mxu0 0.0
    %1729 = vmatpush1.msra.mxu0 0.0
    %1730 = vmatprep.subr.mxu0 0.0
    %1731 = vmatpush1.msra.mxu0 0.0
    %1732 = vmatprep.subr.mxu0 0.0
    %1733 = vmatpush1.msra.mxu0 0.0
    %1734 = vmatprep.subr.mxu0 0.0
    %1735 = vmatpush1.msra.mxu0 0.0
    %1736 = vmatprep.subr.mxu0 0.0
    %1737 = vmatpush1.msra.mxu0 0.0
    %1738 = vmatprep.subr.mxu0 0.0
    %1739 = vmatpush1.msra.mxu0 0.0
    %1740 = vmatprep.subr.mxu0 0.0
    %1741 = vmatpush1.msra.mxu0 0.0
    %1742 = vmatprep.subr.mxu0 0.0
    %1743 = vmatpush1.msra.mxu0 0.0
    %1744 = vmatprep.subr.mxu0 0.0
    %1745 = vmatpush1.msra.mxu0 0.0
    %1746 = vmatprep.subr.mxu0 0.0
    %1747 = vmatpush1.msra.mxu0 0.0
    %1748 = vmatprep.subr.mxu0 0.0
    %1749 = vmatpush1.msra.mxu0 0.0
    %1750 = vmatprep.subr.mxu0 0.0
    %1751 = vmatpush1.msra.mxu0 0.0
    %1752 = vmatprep.subr.mxu0 0.0
    %1753 = vmatpush1.msra.mxu0 0.0
    %1754 = vmatprep.subr.mxu0 0.0
    %1755 = vmatpush1.msra.mxu0 0.0
    %1756 = vmatprep.subr.mxu0 0.0
    %1757 = vmatpush1.msra.mxu0 0.0
    %1758 = vmatprep.subr.mxu0 0.0
    %1759 = vmatpush1.msra.mxu0 0.0
    %1760 = vmatprep.subr.mxu0 0.0
    %1761 = vmatpush1.msra.mxu0 0.0
    %1762 = vmatprep.subr.mxu0 0.0
    %1763 = vmatpush1.msra.mxu0 0.0
    %1764 = vmatprep.subr.mxu0 0.0
    %1765 = vmatpush1.msra.mxu0 0.0
    %1766 = vmatprep.subr.mxu0 0.0
    %1767 = vmatpush1.msra.mxu0 0.0
    %1768 = vmatprep.subr.mxu0 0.0
    %1769 = vmatpush1.msra.mxu0 0.0
    %1770 = vmatprep.subr.mxu0 0.0
    %1771 = vmatpush1.msra.mxu0 0.0
    %1772 = vmatprep.subr.mxu0 0.0
    %1773 = vmatpush1.msra.mxu0 0.0
    %1774 = vmatprep.subr.mxu0 0.0
    %1775 = vmatpush1.msra.mxu0 0.0
    %1776 = vmatprep.mubr.f32.mxu0 0.0
    %1777 = vmatmul.mubr.f32.gmra.mrb[0].mxu0 %v1710
    %v1778 = vpop.f32.mrb[0].mxu0
    %v1779 = vadd.f32 %v372, %v1778
    %v1780 = vpop.f32.mrb[0].mxu0
    %1781 = vdwg.mxu0
    %v1782 = vmul.f32 %v1779, 0.70710677
    %v1783 = vsel %vm1144, %v1782, -inf
    %1784 = vmax.xlane.f32.xlu0 %v1783
    %v1785 = vpop.xlane.xlu0 %1784
    %v1786 = vsub.f32 %v1782, %v1785
    %v1787 = vmul.f32 %v1786, 1.442695
    %v1788 = vpow.pop %v1787
    %v1789 = vsel %vm1144, %v1788, 0.0
    %1790 = vadd.xlane.f32.xlu0 %v1789
    %v1791 = vpop.xlane.xlu0 %1790
    %v1792 = vrcp.pop %v1791
    %v1793 = vmul.f32 %v1788, %v1792
    %v1795 = vsel %vm1144, %v1793, 0
    %1797 = vmatprep.subr.mxu0 0.0
    %1798 = vmatpush1.msra.mxu0 %v478
    %1799 = vmatprep.subr.mxu0 0.0
    %1800 = vmatpush1.msra.mxu0 0.0
    %1801 = vmatprep.subr.mxu0 0.0
    %1802 = vmatpush1.msra.mxu0 0.0
    %1803 = vmatprep.subr.mxu0 0.0
    %1804 = vmatpush1.msra.mxu0 0.0
    %1805 = vmatprep.subr.mxu0 0.0
    %1806 = vmatpush1.msra.mxu0 0.0
    %1807 = vmatprep.subr.mxu0 0.0
    %1808 = vmatpush1.msra.mxu0 0.0
    %1809 = vmatprep.subr.mxu0 0.0
    %1810 = vmatpush1.msra.mxu0 0.0
    %1811 = vmatprep.subr.mxu0 0.0
    %1812 = vmatpush1.msra.mxu0 0.0
    %1813 = vmatprep.subr.mxu0 0.0
    %1814 = vmatpush1.msra.mxu0 0.0
    %1815 = vmatprep.subr.mxu0 0.0
    %1816 = vmatpush1.msra.mxu0 0.0
    %1817 = vmatprep.subr.mxu0 0.0
    %1818 = vmatpush1.msra.mxu0 0.0
    %1819 = vmatprep.subr.mxu0 0.0
    %1820 = vmatpush1.msra.mxu0 0.0
    %1821 = vmatprep.subr.mxu0 0.0
    %1822 = vmatpush1.msra.mxu0 0.0
    %1823 = vmatprep.subr.mxu0 0.0
    %1824 = vmatpush1.msra.mxu0 0.0
    %1825 = vmatprep.subr.mxu0 0.0
    %1826 = vmatpush1.msra.mxu0 0.0
    %1827 = vmatprep.subr.mxu0 0.0
    %1828 = vmatpush1.msra.mxu0 0.0
    %1829 = vmatprep.subr.mxu0 0.0
    %1830 = vmatpush1.msra.mxu0 0.0
    %1831 = vmatprep.subr.mxu0 0.0
    %1832 = vmatpush1.msra.mxu0 0.0
    %1833 = vmatprep.subr.mxu0 0.0
    %1834 = vmatpush1.msra.mxu0 0.0
    %1835 = vmatprep.subr.mxu0 0.0
    %1836 = vmatpush1.msra.mxu0 0.0
    %1837 = vmatprep.subr.mxu0 0.0
    %1838 = vmatpush1.msra.mxu0 0.0
    %1839 = vmatprep.subr.mxu0 0.0
    %1840 = vmatpush1.msra.mxu0 0.0
    %1841 = vmatprep.subr.mxu0 0.0
    %1842 = vmatpush1.msra.mxu0 0.0
    %1843 = vmatprep.subr.mxu0 0.0
    %1844 = vmatpush1.msra.mxu0 0.0
    %1845 = vmatprep.subr.mxu0 0.0
    %1846 = vmatpush1.msra.mxu0 0.0
    %1847 = vmatprep.subr.mxu0 0.0
    %1848 = vmatpush1.msra.mxu0 0.0
    %1849 = vmatprep.subr.mxu0 0.0
    %1850 = vmatpush1.msra.mxu0 0.0
    %1851 = vmatprep.subr.mxu0 0.0
    %1852 = vmatpush1.msra.mxu0 0.0
    %1853 = vmatprep.subr.mxu0 0.0
    %1854 = vmatpush1.msra.mxu0 0.0
    %1855 = vmatprep.subr.mxu0 0.0
    %1856 = vmatpush1.msra.mxu0 0.0
    %1857 = vmatprep.subr.mxu0 0.0
    %1858 = vmatpush1.msra.mxu0 0.0
    %1859 = vmatprep.subr.mxu0 0.0
    %1860 = vmatpush1.msra.mxu0 0.0
    %1861 = vmatprep.mubr.f32.mxu0 0.0
    %1862 = vmatmul.mubr.f32.gmra.mrb[0].mxu0 %v1795
    %v1863 = vpop.f32.mrb[0].mxu0
    %v1864 = vadd.f32 %v1159, %v1863
    %v1865 = vpop.f32.mrb[0].mxu0
    %1866 = vdwg.mxu0
    %v1868 = vsel %vm788, %v1708, 0
    %1870 = vmatprep.subr.mxu0 0.0
    %1871 = vmatpush1.msra.mxu0 %v552
    %1872 = vmatprep.subr.mxu0 0.0
    %1873 = vmatpush1.msra.mxu0 %v557
    %1874 = vmatprep.subr.mxu0 0.0
    %1875 = vmatpush1.msra.mxu0 %v562
    %1876 = vmatprep.subr.mxu0 0.0
    %1877 = vmatpush1.msra.mxu0 %v567
    %1878 = vmatprep.subr.mxu0 0.0
    %1879 = vmatpush1.msra.mxu0 0.0
    %1880 = vmatprep.subr.mxu0 0.0
    %1881 = vmatpush1.msra.mxu0 0.0
    %1882 = vmatprep.subr.mxu0 0.0
    %1883 = vmatpush1.msra.mxu0 0.0
    %1884 = vmatprep.subr.mxu0 0.0
    %1885 = vmatpush1.msra.mxu0 0.0
    %1886 = vmatprep.subr.mxu0 0.0
    %1887 = vmatpush1.msra.mxu0 0.0
    %1888 = vmatprep.subr.mxu0 0.0
    %1889 = vmatpush1.msra.mxu0 0.0
    %1890 = vmatprep.subr.mxu0 0.0
    %1891 = vmatpush1.msra.mxu0 0.0
    %1892 = vmatprep.subr.mxu0 0.0
    %1893 = vmatpush1.msra.mxu0 0.0
    %1894 = vmatprep.subr.mxu0 0.0
    %1895 = vmatpush1.msra.mxu0 0.0
    %1896 = vmatprep.subr.mxu0 0.0
    %1897 = vmatpush1.msra.mxu0 0.0
    %1898 = vmatprep.subr.mxu0 0.0
    %1899 = vmatpush1.msra.mxu0 0.0
    %1900 = vmatprep.subr.mxu0 0.0
    %1901 = vmatpush1.msra.mxu0 0.0
    %1902 = vmatprep.subr.mxu0 0.0
    %1903 = vmatpush1.msra.mxu0 0.0
    %1904 = vmatprep.subr.mxu0 0.0
    %1905 = vmatpush1.msra.mxu0 0.0
    %1906 = vmatprep.subr.mxu0 0.0
    %1907 = vmatpush1.msra.mxu0 0.0
    %1908 = vmatprep.subr.mxu0 0.0
    %1909 = vmatpush1.msra.mxu0 0.0
    %1910 = vmatprep.subr.mxu0 0.0
    %1911 = vmatpush1.msra.mxu0 0.0
    %1912 = vmatprep.subr.mxu0 0.0
    %1913 = vmatpush1.msra.mxu0 0.0
    %1914 = vmatprep.subr.mxu0 0.0
    %1915 = vmatpush1.msra.mxu0 0.0
    %1916 = vmatprep.subr.mxu0 0.0
    %1917 = vmatpush1.msra.mxu0 0.0
    %1918 = vmatprep.subr.mxu0 0.0
    %1919 = vmatpush1.msra.mxu0 0.0
    %1920 = vmatprep.subr.mxu0 0.0
    %1921 = vmatpush1.msra.mxu0 0.0
    %1922 = vmatprep.subr.mxu0 0.0
    %1923 = vmatpush1.msra.mxu0 0.0
    %1924 = vmatprep.subr.mxu0 0.0
    %1925 = vmatpush1.msra.mxu0 0.0
    %1926 = vmatprep.subr.mxu0 0.0
    %1927 = vmatpush1.msra.mxu0 0.0
    %1928 = vmatprep.subr.mxu0 0.0
    %1929 = vmatpush1.msra.mxu0 0.0
    %1930 = vmatprep.subr.mxu0 0.0
    %1931 = vmatpush1.msra.mxu0 0.0
    %1932 = vmatprep.subr.mxu0 0.0
    %1933 = vmatpush1.msra.mxu0 0.0
    %1934 = vmatprep.mubr.f32.mxu0 0.0
    %1935 = vmatmul.mubr.f32.gmra.mrb[0].mxu0 %v1868
    %v1936 = vpop.f32.mrb[0].mxu0
    %v1937 = vadd.f32 %v641, %v1936
    %v1938 = vpop.f32.mrb[0].mxu0
    %1939 = vdwg.mxu0
    %v1940 = vmul.f32 %v1937, 0.70710677
    %v1941 = vsel %vm1144, %v1940, -inf
    %1942 = vmax.xlane.f32.xlu0 %v1941
    %v1943 = vpop.xlane.xlu0 %1942
    %v1944 = vsub.f32 %v1940, %v1943
    %v1945 = vmul.f32 %v1944, 1.442695
    %v1946 = vpow.pop %v1945
    %v1947 = vsel %vm1144, %v1946, 0.0
    %1948 = vadd.xlane.f32.xlu0 %v1947
    %v1949 = vpop.xlane.xlu0 %1948
    %v1950 = vrcp.pop %v1949
    %v1951 = vmul.f32 %v1946, %v1950
    %v1953 = vsel %vm1144, %v1951, 0
    %1955 = vmatprep.subr.mxu0 0.0
    %1956 = vmatpush1.msra.mxu0 %v715
    %1957 = vmatprep.subr.mxu0 0.0
    %1958 = vmatpush1.msra.mxu0 0.0
    %1959 = vmatprep.subr.mxu0 0.0
    %1960 = vmatpush1.msra.mxu0 0.0
    %1961 = vmatprep.subr.mxu0 0.0
    %1962 = vmatpush1.msra.mxu0 0.0
    %1963 = vmatprep.subr.mxu0 0.0
    %1964 = vmatpush1.msra.mxu0 0.0
    %1965 = vmatprep.subr.mxu0 0.0
    %1966 = vmatpush1.msra.mxu0 0.0
    %1967 = vmatprep.subr.mxu0 0.0
    %1968 = vmatpush1.msra.mxu0 0.0
    %1969 = vmatprep.subr.mxu0 0.0
    %1970 = vmatpush1.msra.mxu0 0.0
    %1971 = vmatprep.subr.mxu0 0.0
    %1972 = vmatpush1.msra.mxu0 0.0
    %1973 = vmatprep.subr.mxu0 0.0
    %1974 = vmatpush1.msra.mxu0 0.0
    %1975 = vmatprep.subr.mxu0 0.0
    %1976 = vmatpush1.msra.mxu0 0.0
    %1977 = vmatprep.subr.mxu0 0.0
    %1978 = vmatpush1.msra.mxu0 0.0
    %1979 = vmatprep.subr.mxu0 0.0
    %1980 = vmatpush1.msra.mxu0 0.0
    %1981 = vmatprep.subr.mxu0 0.0
    %1982 = vmatpush1.msra.mxu0 0.0
    %1983 = vmatprep.subr.mxu0 0.0
    %1984 = vmatpush1.msra.mxu0 0.0
    %1985 = vmatprep.subr.mxu0 0.0
    %1986 = vmatpush1.msra.mxu0 0.0
    %1987 = vmatprep.subr.mxu0 0.0
    %1988 = vmatpush1.msra.mxu0 0.0
    %1989 = vmatprep.subr.mxu0 0.0
    %1990 = vmatpush1.msra.mxu0 0.0
    %1991 = vmatprep.subr.mxu0 0.0
    %1992 = vmatpush1.msra.mxu0 0.0
    %1993 = vmatprep.subr.mxu0 0.0
    %1994 = vmatpush1.msra.mxu0 0.0
    %1995 = vmatprep.subr.mxu0 0.0
    %1996 = vmatpush1.msra.mxu0 0.0
    %1997 = vmatprep.subr.mxu0 0.0
    %1998 = vmatpush1.msra.mxu0 0.0
    %1999 = vmatprep.subr.mxu0 0.0
    %2000 = vmatpush1.msra.mxu0 0.0
    %2001 = vmatprep.subr.mxu0 0.0
    %2002 = vmatpush1.msra.mxu0 0.0
    %2003 = vmatprep.subr.mxu0 0.0
    %2004 = vmatpush1.msra.mxu0 0.0
    %2005 = vmatprep.subr.mxu0 0.0
    %2006 = vmatpush1.msra.mxu0 0.0
    %2007 = vmatprep.subr.mxu0 0.0
    %2008 = vmatpush1.msra.mxu0 0.0
    %2009 = vmatprep.subr.mxu0 0.0
    %2010 = vmatpush1.msra.mxu0 0.0
    %2011 = vmatprep.subr.mxu0 0.0
    %2012 = vmatpush1.msra.mxu0 0.0
    %2013 = vmatprep.subr.mxu0 0.0
    %2014 = vmatpush1.msra.mxu0 0.0
    %2015 = vmatprep.subr.mxu0 0.0
    %2016 = vmatpush1.msra.mxu0 0.0
    %2017 = vmatprep.subr.mxu0 0.0
    %2018 = vmatpush1.msra.mxu0 0.0
    %2019 = vmatprep.mubr.f32.mxu0 0.0
    %2020 = vmatmul.mubr.f32.gmra.mrb[0].mxu0 %v1953
    %v2021 = vpop.f32.mrb[0].mxu0
    %v2022 = vadd.f32 %v1159, %v2021
    %v2023 = vpop.f32.mrb[0].mxu0
    %2024 = vdwg.mxu0
    %v2025 = vadd.f32 %v1707, %v1864
    %v2026 = vadd.f32 %v1708, %v2022
    %v2027 = vmul.f32 %v2025, 0.70710677
    %v2028 = vmul.f32 %v2026, 0.70710677
    %v2029 = vadd.f32 %v2027, %v1397
    %v2030 = vadd.f32 %v2028, %v1398
    %v2031 = vmul.f32 %v2029, 0.70710677
    %v2032 = vmul.f32 %v2030, 0.70710677
    %v2033 = vlaneseq
    %v2034 = vshrl.u32 %v2033, 7
    %v2035 = vsub.s32 0, %v2034
    %v2036 = vrot.slane %v109, %v2035
    %2037 = vrot.lane.b32.xlu0 %v102, 64
    %v2038 = vpop.permute.xlu0 %2037
    %2039 = vrot.lane.b32.xlu0 %v103, 64
    %v2040 = vpop.permute.xlu0 %2039
    %2041 = vrot.lane.b32.xlu0 %v104, 64
    %v2042 = vpop.permute.xlu0 %2041
    %2043 = vrot.lane.b32.xlu0 %v105, 64
    %v2044 = vpop.permute.xlu0 %2043
    %v2050 = vsel %vm788, %v2031, 0
    %v2053 = vsel %vm788, %v2032, 0
    %2055 = vmatprep.subr.mxu0 0.0
    %2056 = vmatpush1.msra.mxu0 %v2038
    %2057 = vmatprep.subr.mxu0 0.0
    %2058 = vmatpush1.msra.mxu0 %v2040
    %2059 = vmatprep.subr.mxu0 0.0
    %2060 = vmatpush1.msra.mxu0 %v2042
    %2061 = vmatprep.subr.mxu0 0.0
    %2062 = vmatpush1.msra.mxu0 %v2044
    %2063 = vmatprep.subr.mxu0 0.0
    %2064 = vmatpush1.msra.mxu0 0.0
    %2065 = vmatprep.subr.mxu0 0.0
    %2066 = vmatpush1.msra.mxu0 0.0
    %2067 = vmatprep.subr.mxu0 0.0
    %2068 = vmatpush1.msra.mxu0 0.0
    %2069 = vmatprep.subr.mxu0 0.0
    %2070 = vmatpush1.msra.mxu0 0.0
    %2071 = vmatprep.subr.mxu0 0.0
    %2072 = vmatpush1.msra.mxu0 0.0
    %2073 = vmatprep.subr.mxu0 0.0
    %2074 = vmatpush1.msra.mxu0 0.0
    %2075 = vmatprep.subr.mxu0 0.0
    %2076 = vmatpush1.msra.mxu0 0.0
    %2077 = vmatprep.subr.mxu0 0.0
    %2078 = vmatpush1.msra.mxu0 0.0
    %2079 = vmatprep.subr.mxu0 0.0
    %2080 = vmatpush1.msra.mxu0 0.0
    %2081 = vmatprep.subr.mxu0 0.0
    %2082 = vmatpush1.msra.mxu0 0.0
    %2083 = vmatprep.subr.mxu0 0.0
    %2084 = vmatpush1.msra.mxu0 0.0
    %2085 = vmatprep.subr.mxu0 0.0
    %2086 = vmatpush1.msra.mxu0 0.0
    %2087 = vmatprep.subr.mxu0 0.0
    %2088 = vmatpush1.msra.mxu0 0.0
    %2089 = vmatprep.subr.mxu0 0.0
    %2090 = vmatpush1.msra.mxu0 0.0
    %2091 = vmatprep.subr.mxu0 0.0
    %2092 = vmatpush1.msra.mxu0 0.0
    %2093 = vmatprep.subr.mxu0 0.0
    %2094 = vmatpush1.msra.mxu0 0.0
    %2095 = vmatprep.subr.mxu0 0.0
    %2096 = vmatpush1.msra.mxu0 0.0
    %2097 = vmatprep.subr.mxu0 0.0
    %2098 = vmatpush1.msra.mxu0 0.0
    %2099 = vmatprep.subr.mxu0 0.0
    %2100 = vmatpush1.msra.mxu0 0.0
    %2101 = vmatprep.subr.mxu0 0.0
    %2102 = vmatpush1.msra.mxu0 0.0
    %2103 = vmatprep.subr.mxu0 0.0
    %2104 = vmatpush1.msra.mxu0 0.0
    %2105 = vmatprep.subr.mxu0 0.0
    %2106 = vmatpush1.msra.mxu0 0.0
    %2107 = vmatprep.subr.mxu0 0.0
    %2108 = vmatpush1.msra.mxu0 0.0
    %2109 = vmatprep.subr.mxu0 0.0
    %2110 = vmatpush1.msra.mxu0 0.0
    %2111 = vmatprep.subr.mxu0 0.0
    %2112 = vmatpush1.msra.mxu0 0.0
    %2113 = vmatprep.subr.mxu0 0.0
    %2114 = vmatpush1.msra.mxu0 0.0
    %2115 = vmatprep.subr.mxu0 0.0
    %2116 = vmatpush1.msra.mxu0 0.0
    %2117 = vmatprep.subr.mxu0 0.0
    %2118 = vmatpush1.msra.mxu0 0.0
    %2119 = vmatprep.mubr.f32.mxu0 0.0
    %2120 = vmatmul.mubr.f32.gmra.mrb[0].mxu0 %v2050
    %v2121 = vpop.f32.mrb[0].mxu0
    %v2122 = vadd.f32 %v2036, %v2121
    %v2123 = vpop.f32.mrb[0].mxu0
    %2124 = vmatprep.mubr.f32.mxu0 0.0
    %2125 = vmatmul.mubr.f32.gmra.mrb[0].mxu0 %v2053
    %v2126 = vpop.f32.mrb[0].mxu0
    %v2127 = vadd.f32 %v2036, %v2126
    %v2128 = vpop.f32.mrb[0].mxu0
    %2129 = vdwg.mxu0
    %2130 = vrot.lane.b32.xlu0 %v1793, 16
    %v2131 = vpop.permute.xlu0 %2130
    %2132 = vrot.lane.b32.xlu0 %v1951, 16
    %v2133 = vpop.permute.xlu0 %2132
    %vm2136 = vcmask 130048
    %v2137 = vsel %vm2136, %v2122, %v2131
    %v2138 = vsel %vm2136, %v2127, %v2133
    %vm2139 = vcmask 195584
    %v2140 = vsel %vm2139, %v2137, 0.0
    %v2141 = vsel %vm2139, %v2138, 0.0
    %2142 = vst [vmem:[#allocation11] sm:$0xff] %v2140
    %2143 = vst [vmem:[#allocation11 + $0x8] sm:$0xff] %v2141
    // Predicated region
    $region46: #{tpu_custom_call.1} parent=1 // pred_check
      _
    $region47: #{tpu_custom_call.1} parent=1 // pred_check_branch
      %2145 = sbr.rel (0) target = $region49
    $region48: #{tpu_custom_call.1} parent=1 // pred_region
      %s2147 = ssub.s32 256, 256
      %2148 = vsyncadd [#allocation4], %s2147
      %s2149 = sshll.u32 [#allocation11], 4
      %s2150 = int_to_ptr.vmem [resolvable:$true] %s2149
      %2155 = dma.vmem_to_hbm [thread:$0]  %s2150, 256, %s6, [#allocation4], 128, 128, 8
    $region49: #{tpu_custom_call.1} parent=1 // pred_fallthru
      _
    // Predicated region
    $region50: #{tpu_custom_call.1} parent=1 // pred_check
      _
    $region51: #{tpu_custom_call.1} parent=1 // pred_check_branch
      %2157 = sbr.rel (0) target = $region53
    $region52: #{tpu_custom_call.1} parent=1 // pred_region
      %2158 = dma.done [#allocation4], 256
    $region53: #{tpu_custom_call.1} parent=1 // pred_fallthru
      _
    %2159 = vsyncpa [#allocation3], 1
    %2160 = vsyncpa [#allocation6], 1
    %2161 = vsyncpa [#allocation9], 1
    %2162 = vsyncpa [#allocation4], 1

</llo_original>
